<compile_context>
chip_gen: v5e
topology: v5e:2x2
jax: 0.10.0
libtpu: 0.0.40
codegen_flags: <defaults>
</compile_context>

<pallas_src>
import functools
import math

import jax
import jax.numpy as jnp
from jax import lax
from jax.experimental import pallas as pl
from jax.experimental.pallas import tpu as pltpu

LW = 128  # lane width: every in-kernel tensor is padded to 128 lanes


# ----------------------------------------------------------------------------
# Fused kernel: both GRU streams (block-diagonal fused) + both heads.
# ----------------------------------------------------------------------------
def _fused_forward_kernel(x_ref, w_ref, b_ref, out_ref, seq_ref, *,
                          n_layers, T_r, T_p, B, H, n_stocks):
    T_max = max(T_r, T_p)

    def bias(i):                       # (1, LW) row of the packed bias slab
        return b_ref[i:i + 1, :]

    lane = lax.broadcasted_iota(jnp.int32, (1, LW), 1)
    ret_sel = lane < H                                   # returns-hidden lanes [0, H)
    prob_sel = (lane >= H) & (lane < 2 * H)              # prob-hidden lanes   [H, 2H)
    m_hid = ret_sel.astype(jnp.float32)                  # head-hidden lanes
    stk_mask = lane < n_stocks                           # real stock lanes

    cur = x_ref[...]                                     # (T_max*B, LW) fused inputs
    h = jnp.zeros((B, LW), jnp.float32)

    for l in range(n_layers):
        wb, bb = 6 * l, 4 * l
        wih_r, wih_z, wih_n = w_ref[wb + 0], w_ref[wb + 1], w_ref[wb + 2]
        whh_r, whh_z, whh_n = w_ref[wb + 3], w_ref[wb + 4], w_ref[wb + 5]

        # Hoisted per-gate input projection for ALL timesteps (input biases
        # pre-folded here) -> only h @ W_hh_{r,z,n} stays on the serial chain.
        gi_r = jnp.dot(cur, wih_r, preferred_element_type=jnp.float32) + bias(bb + 0)
        gi_z = jnp.dot(cur, wih_z, preferred_element_type=jnp.float32) + bias(bb + 1)
        gi_n = jnp.dot(cur, wih_n, preferred_element_type=jnp.float32) + bias(bb + 2)
        b_hn = bias(bb + 3)

        h = jnp.zeros((B, LW), jnp.float32)
        last = (l + 1 == n_layers)
        for t in range(T_max):          # static unroll: T is small at demo size
            s0 = t * B
            r = jax.nn.sigmoid(
                gi_r[s0:s0 + B, :]
                + jnp.dot(h, whh_r, preferred_element_type=jnp.float32))
            z = jax.nn.sigmoid(
                gi_z[s0:s0 + B, :]
                + jnp.dot(h, whh_z, preferred_element_type=jnp.float32))
            n = jnp.tanh(
                gi_n[s0:s0 + B, :]
                + r * (jnp.dot(h, whh_n, preferred_element_type=jnp.float32) + b_hn))
            h_new = (1.0 - z) * n + z * h
            if t < T_r and t < T_p:
                h = h_new
            elif t < T_r:               # prob stream already done: freeze its lanes
                h = jnp.where(ret_sel, h_new, h)
            else:                       # returns stream already done: freeze its lanes
                h = jnp.where(prob_sel, h_new, h)
            if not last:
                seq_ref[s0:s0 + B, :] = h          # bounded live range, no concat
        if not last:
            cur = seq_ref[...]

    # ---- heads: Linear -> LayerNorm -> SiLU -> (Dropout=identity) -> Linear ----
    inv_h = 1.0 / H

    def head(w1_i, w2_i, bvi):
        w1, w2 = w_ref[w1_i], w_ref[w2_i]
        b1, gamma, beta, b2 = bias(bvi), bias(bvi + 1), bias(bvi + 2), bias(bvi + 3)
        # h already is [h_returns | h_prob] -> the torch.cat is free.
        h1 = jnp.dot(h, w1, preferred_element_type=jnp.float32) + b1   # lanes [0,H) real
        mu = jnp.sum(h1 * m_hid, axis=-1, keepdims=True) * inv_h       # masked LayerNorm
        d = (h1 - mu) * m_hid
        var = jnp.sum(d * d, axis=-1, keepdims=True) * inv_h
        hn = d * lax.rsqrt(var + 1e-5) * gamma + beta                  # pad lanes stay 0
        s = hn * jax.nn.sigmoid(hn)                                    # SiLU
        return jnp.dot(s, w2, preferred_element_type=jnp.float32) + b2  # lanes [0,n_stocks)

    hw, hb = 6 * n_layers, 4 * n_layers
    attn_logits = head(hw + 0, hw + 1, hb + 0)
    score_logits = head(hw + 2, hw + 3, hb + 4)

    attn = jax.nn.sigmoid(attn_logits)
    # masked (lane-padded) softmax over the real n_stocks lanes
    neg = jnp.where(stk_mask, score_logits, -jnp.inf)
    mx = jnp.max(neg, axis=-1, keepdims=True)
    e = jnp.exp(jnp.where(stk_mask, score_logits - mx, -jnp.inf))
    probs = e / jnp.sum(e, axis=-1, keepdims=True)

    # One lane-dense output slab; both stores are full 128-lane, tile-aligned.
    out_ref[:, 0:LW] = attn
    out_ref[:, LW:2 * LW] = probs


def fused_gru_and_heads(packed, x_returns, x_probs, *, n_layers, hidden_dim, n_stocks):
    """Runs the fused kernel. Returns (attention_weights, weights), each (B, n_stocks)."""
    Bb, T_r, N = x_returns.shape
    T_p = x_probs.shape[1]
    assert N == n_stocks and x_probs.shape[2] == n_stocks
    H = hidden_dim
    assert 2 * H <= LW and 2 * n_stocks <= LW, "demo kernel assumes 2H, 2N <= 128 lanes"
    T_max = max(T_r, T_p)
    B_pad = max(8, ((Bb + 7) // 8) * 8)

    # Fused, lane-padded, time-major input: lanes [0,N) = returns, [N,2N) = probs.
    xcat = jnp.zeros((T_max, B_pad, LW), jnp.float32)
    xcat = xcat.at[:T_r, :Bb, 0:N].set(jnp.transpose(x_returns, (1, 0, 2)).astype(jnp.float32))
    xcat = xcat.at[:T_p, :Bb, N:2 * N].set(jnp.transpose(x_probs, (1, 0, 2)).astype(jnp.float32))
    xcat2d = xcat.reshape(T_max * B_pad, LW)

    wmat, bvec = packed["wmat"], packed["bvec"]
    NW, NBp = wmat.shape[0], bvec.shape[0]

    kern = functools.partial(_fused_forward_kernel, n_layers=n_layers,
                             T_r=T_r, T_p=T_p, B=B_pad, H=H, n_stocks=n_stocks)
    out = pl.pallas_call(
        kern,
        out_shape=jax.ShapeDtypeStruct((B_pad, 2 * LW), jnp.float32),
        grid_spec=pltpu.PrefetchScalarGridSpec(
            num_scalar_prefetch=0,
            grid=(1,),                       # recurrence unrolled inside one grid step
            in_specs=[pl.BlockSpec((T_max * B_pad, LW), lambda i: (0, 0)),
                      pl.BlockSpec((NW, LW, LW), lambda i: (0, 0, 0)),
                      pl.BlockSpec((NBp, LW), lambda i: (0, 0))],
            out_specs=pl.BlockSpec((B_pad, 2 * LW), lambda i: (0, 0)),
            scratch_shapes=[pltpu.VMEM((T_max * B_pad, LW), jnp.float32)],
        ),
        compiler_params=pltpu.CompilerParams(dimension_semantics=("arbitrary",)),
    )(xcat2d, wmat, bvec)

    attention_weights = out[:Bb, 0:n_stocks]
    weights = out[:Bb, LW:LW + n_stocks]
    return attention_weights, weights


# ----------------------------------------------------------------------------
# Rebalance (per-sample iterative clamp/redistribute) — data-dependent loop in JAX
# ----------------------------------------------------------------------------
def _rebalance_one(w, lb, ub):
    selected = (w > 0).astype(w.dtype)
    w = w * selected
    wc = jnp.clip(w, lb, ub)
    excess0 = jnp.sum(wc) - 1.0

    def cond(state):
        _, excess, brk, it = state
        # Iteration cap guards against a non-terminating while_loop on TPU;
        # the PyTorch loop has no cap but converges in a handful of steps.
        return (jnp.abs(excess) > 1e-6) & (~brk) & (it < 1000)

    def body(state):
        wc, excess, _, it = state
        pos = excess > 0
        adj = jnp.where(pos, (wc > lb) & (selected == 1), (wc < ub) & (selected == 1))
        any_adj = jnp.any(adj)
        cnt = jnp.maximum(jnp.sum(adj.astype(wc.dtype)), 1.0)
        # both PyTorch branches reduce to: wc[adj] -= excess / cnt
        new_wc = jnp.where(adj, wc - excess / cnt, wc)
        new_wc = jnp.clip(new_wc, lb, ub)
        new_excess = jnp.sum(new_wc) - 1.0
        wc_out = jnp.where(any_adj, new_wc, wc)
        excess_out = jnp.where(any_adj, new_excess, excess)
        return (wc_out, excess_out, ~any_adj, it + 1)

    wc, _, _, _ = lax.while_loop(cond, body, (wc, excess0, False, 0))
    return wc


# ----------------------------------------------------------------------------
# Full forward pass
# ----------------------------------------------------------------------------
def portfolio_gru_with_prob_forward(packed, x_returns, x_probs, *,
                                    n_layers, hidden_dim, n_stocks,
                                    n_select, lb, ub):
    if x_probs.ndim == 2:
        x_probs = x_probs[:, None, :]

    attention_weights, weights = fused_gru_and_heads(
        packed, x_returns, x_probs,
        n_layers=n_layers, hidden_dim=hidden_dim, n_stocks=n_stocks)

    B = attention_weights.shape[0]
    _, topk_idx = lax.top_k(attention_weights, n_select)
    # TODO(synk): lax.top_k tie-breaking order may differ from torch.topk on exact ties.
    mask = jnp.zeros_like(attention_weights).at[
        jnp.arange(B)[:, None], topk_idx].set(1.0)

    masked_weights = weights * mask
    normalized = masked_weights / (jnp.sum(masked_weights, axis=1, keepdims=True) + 1e-8)
    final_weights = jax.vmap(lambda w: _rebalance_one(w, lb, ub))(normalized)
    return final_weights


# ----------------------------------------------------------------------------
# Parameter init (PyTorch layout) + one-time packing into the two kernel slabs
# ----------------------------------------------------------------------------
def init_params(key, n_layers, hidden_dim, n_stocks):
    """Parameters in nn.GRU / nn.Linear / nn.LayerNorm layout."""
    H = hidden_dim
    k = 1.0 / math.sqrt(H)

    def uni(key, shape, kk):
        return jax.random.uniform(key, shape, jnp.float32, -kk, kk)

    def gru_params(key, input_dim):
        layers = []
        for l in range(n_layers):
            d_in = input_dim if l == 0 else H
            key, k1, k2, k3, k4 = jax.random.split(key, 5)
            layers.append(dict(
                w_ih=uni(k1, (3 * H, d_in), k),
                w_hh=uni(k2, (3 * H, H), k),
                b_ih=uni(k3, (3 * H,), k),
                b_hh=uni(k4, (3 * H,), k),
            ))
        return layers, key

    def head_params(key, d_in):
        key, k1, k2, k3, k4 = jax.random.split(key, 5)
        kk1 = 1.0 / math.sqrt(d_in)
        kk2 = 1.0 / math.sqrt(H)
        return dict(
            w1=uni(k1, (H, d_in), kk1),
            b1=uni(k2, (H,), kk1),
            gamma=jnp.ones((H,), jnp.float32),
            beta=jnp.zeros((H,), jnp.float32),
            w2=uni(k3, (n_stocks, H), kk2),
            b2=uni(k4, (n_stocks,), kk2),
        ), key

    gru, key = gru_params(key, n_stocks)
    gru_prob, key = gru_params(key, n_stocks)
    attention, key = head_params(key, 2 * H)   # scale=1 (unidirectional) * 2 (concat)
    score, key = head_params(key, 2 * H)
    return dict(gru=gru, gru_prob=gru_prob, attention=attention, score=score)


def pack_params(params):
    """One-time fold of PyTorch-layout params into two kernel slabs:
         wmat : (6L+4, 128, 128)  per-gate, block-diagonal (two-stream) weights + head W1/W2
         bvec : (pad(4L+8), 128)  per-gate fused biases + head b1/gamma/beta/b2
    Done once, outside jit, so no per-call XLA ops."""
    H = params["gru"][0]["w_hh"].shape[1]
    n_stocks = params["gru"][0]["w_ih"].shape[1]
    L = len(params["gru"])
    assert 2 * H <= LW and 2 * n_stocks <= LW, "demo packing assumes 2H, 2N <= 128 lanes"

    def padmat(blocks):
        m = jnp.zeros((LW, LW), jnp.float32)
        for (r0, c0, blk) in blocks:
            m = m.at[r0:r0 + blk.shape[0], c0:c0 + blk.shape[1]].set(blk)
        return m

    def padvec(segs):
        v = jnp.zeros((LW,), jnp.float32)
        for (c0, blk) in segs:
            v = v.at[c0:c0 + blk.shape[0]].set(blk)
        return v

    mats, vecs = [], []
    for l in range(L):
        lr = params["gru"][l]        # returns stream
        lp = params["gru_prob"][l]   # prob stream
        d_in = lr["w_ih"].shape[1]   # n_stocks for l=0, else H (matches xcat / hcat layout)
        for g in range(3):           # PyTorch gate order: r, z, n
            wr = lr["w_ih"][g * H:(g + 1) * H, :].T       # (d_in, H)
            wp = lp["w_ih"][g * H:(g + 1) * H, :].T
            mats.append(padmat([(0, 0, wr), (d_in, H, wp)]))    # block-diagonal W_ih
        for g in range(3):
            wr = lr["w_hh"][g * H:(g + 1) * H, :].T       # (H, H)
            wp = lp["w_hh"][g * H:(g + 1) * H, :].T
            mats.append(padmat([(0, 0, wr), (H, H, wp)]))       # block-diagonal W_hh
        bri, bpi = lr["b_ih"], lp["b_ih"]
        brh, bph = lr["b_hh"], lp["b_hh"]
        vecs.append(padvec([(0, bri[0:H] + brh[0:H]), (H, bpi[0:H] + bph[0:H])]))            # b_r
        vecs.append(padvec([(0, bri[H:2 * H] + brh[H:2 * H]),
                            (H, bpi[H:2 * H] + bph[H:2 * H])]))                               # b_z
        vecs.append(padvec([(0, bri[2 * H:]), (H, bpi[2 * H:])]))                             # b_in
        vecs.append(padvec([(0, brh[2 * H:]), (H, bph[2 * H:])]))                             # b_hn

    for name in ("attention", "score"):
        hp = params[name]
        mats.append(padmat([(0, 0, hp["w1"].T)]))   # (2H, H)
        mats.append(padmat([(0, 0, hp["w2"].T)]))   # (H, n_stocks)
        vecs.append(padvec([(0, hp["b1"])]))
        vecs.append(padvec([(0, hp["gamma"])]))
        vecs.append(padvec([(0, hp["beta"])]))
        vecs.append(padvec([(0, hp["b2"])]))

    wmat = jnp.stack(mats)                          # (6L+4, 128, 128)
    NB = len(vecs)
    NB_pad = ((NB + 7) // 8) * 8
    bvec = jnp.zeros((NB_pad, LW), jnp.float32).at[:NB].set(jnp.stack(vecs))
    return dict(wmat=wmat, bvec=bvec)


if __name__ == "__main__":
    # small config: n_layers=1, hidden_dim=32, n_stocks=20, n_select=10, lb=0.0, ub=0.1
    n_layers, hidden_dim, n_stocks = 1, 32, 20
    n_select, lb, ub = 10, 0.0, 0.1
    B, seq_len, pred_len = 2, 8, 4

    key = jax.random.PRNGKey(0)
    kp, kx, kpr = jax.random.split(key, 3)
    params = init_params(kp, n_layers, hidden_dim, n_stocks)
    packed = pack_params(params)     # packing/transposes done once, outside jit

    x_returns = jax.random.normal(kx, (B, seq_len, n_stocks), jnp.float32) * 0.05
    x_probs = jax.nn.sigmoid(jax.random.normal(kpr, (B, pred_len, n_stocks), jnp.float32))

    fwd = jax.jit(functools.partial(
        portfolio_gru_with_prob_forward,
        n_layers=n_layers, hidden_dim=hidden_dim, n_stocks=n_stocks,
        n_select=n_select, lb=lb, ub=ub))
    out = jax.block_until_ready(fwd(packed, x_returns, x_probs))

    assert out.shape == (B, n_stocks)
    assert bool(jnp.all(jnp.isfinite(out)))
    print("KERNEL_OK")
</pallas_src>

<mosaic_0001>
module attributes {stable_mosaic.version = 11 : i64} {
  func.func @_fused_forward_kernel(%arg0: i32, %arg1: memref<64x128xf32, #tpu.memory_space<vmem>>, %arg2: memref<10x128x128xf32, #tpu.memory_space<vmem>>, %arg3: memref<16x128xf32, #tpu.memory_space<vmem>>, %arg4: memref<8x256xf32, #tpu.memory_space<vmem>>, %arg5: memref<64x128xf32, #tpu.memory_space<vmem>>) attributes {dimension_semantics = [#tpu.dimension_semantics<arbitrary>], iteration_bounds = array<i64: 1>, scalar_prefetch = 0 : i64, scratch_operands = 1 : i64, tpu.core_type = #tpu.core_type<tc>, window_params = [{pipeline_mode = #tpu.pipeline_mode<synchronous>, transform_indices = @transform_0, window_bounds = array<i64: 64, 128>}, {pipeline_mode = #tpu.pipeline_mode<synchronous>, transform_indices = @transform_1, window_bounds = array<i64: 10, 128, 128>}, {pipeline_mode = #tpu.pipeline_mode<synchronous>, transform_indices = @transform_2, window_bounds = array<i64: 16, 128>}, {pipeline_mode = #tpu.pipeline_mode<synchronous>, transform_indices = @transform_3, window_bounds = array<i64: 8, 256>}]} {
    %0 = tpu.iota {dimensions = array<i32: 1>} : vector<1x128xi32>
    %c32_i32 = arith.constant 32 : i32
    %1 = vector.broadcast %c32_i32 : i32 to vector<1x128xi32>
    %2 = arith.cmpi slt, %0, %1 : vector<1x128xi32>
    %3 = arith.extui %2 : vector<1x128xi1> to vector<1x128xi32>
    %4 = arith.sitofp %3 : vector<1x128xi32> to vector<1x128xf32>
    %c20_i32 = arith.constant 20 : i32
    %5 = vector.broadcast %c20_i32 : i32 to vector<1x128xi32>
    %6 = arith.cmpi slt, %0, %5 : vector<1x128xi32>
    %c0 = arith.constant 0 : index
    %c0_0 = arith.constant 0 : index
    %7 = vector.load %arg1[%c0, %c0_0] : memref<64x128xf32, #tpu.memory_space<vmem>>, vector<64x128xf32>
    %c0_1 = arith.constant 0 : index
    %c0_2 = arith.constant 0 : index
    %c0_3 = arith.constant 0 : index
    %8 = vector.load %arg2[%c0_1, %c0_2, %c0_3] : memref<10x128x128xf32, #tpu.memory_space<vmem>>, vector<1x128x128xf32>
    %9 = vector.shape_cast %8 : vector<1x128x128xf32> to vector<128x128xf32>
    %c1 = arith.constant 1 : index
    %c0_4 = arith.constant 0 : index
    %c0_5 = arith.constant 0 : index
    %10 = vector.load %arg2[%c1, %c0_4, %c0_5] : memref<10x128x128xf32, #tpu.memory_space<vmem>>, vector<1x128x128xf32>
    %11 = vector.shape_cast %10 : vector<1x128x128xf32> to vector<128x128xf32>
    %c2 = arith.constant 2 : index
    %c0_6 = arith.constant 0 : index
    %c0_7 = arith.constant 0 : index
    %12 = vector.load %arg2[%c2, %c0_6, %c0_7] : memref<10x128x128xf32, #tpu.memory_space<vmem>>, vector<1x128x128xf32>
    %13 = vector.shape_cast %12 : vector<1x128x128xf32> to vector<128x128xf32>
    %c3 = arith.constant 3 : index
    %c0_8 = arith.constant 0 : index
    %c0_9 = arith.constant 0 : index
    %14 = vector.load %arg2[%c3, %c0_8, %c0_9] : memref<10x128x128xf32, #tpu.memory_space<vmem>>, vector<1x128x128xf32>
    %15 = vector.shape_cast %14 : vector<1x128x128xf32> to vector<128x128xf32>
    %c4 = arith.constant 4 : index
    %c0_10 = arith.constant 0 : index
    %c0_11 = arith.constant 0 : index
    %16 = vector.load %arg2[%c4, %c0_10, %c0_11] : memref<10x128x128xf32, #tpu.memory_space<vmem>>, vector<1x128x128xf32>
    %17 = vector.shape_cast %16 : vector<1x128x128xf32> to vector<128x128xf32>
    %c5 = arith.constant 5 : index
    %c0_12 = arith.constant 0 : index
    %c0_13 = arith.constant 0 : index
    %18 = vector.load %arg2[%c5, %c0_12, %c0_13] : memref<10x128x128xf32, #tpu.memory_space<vmem>>, vector<1x128x128xf32>
    %19 = vector.shape_cast %18 : vector<1x128x128xf32> to vector<128x128xf32>
    %cst = arith.constant dense<0.000000e+00> : vector<64x128xf32>
    %20 = tpu.matmul %7, %9, %cst {dimension_numbers = #tpu.dot_dimension_numbers<[1], [0], [0], [1], [0, 0, 1, 1], [], []>} : vector<64x128xf32>, vector<128x128xf32>, vector<64x128xf32> -> vector<64x128xf32>
    %c0_14 = arith.constant 0 : index
    %c0_15 = arith.constant 0 : index
    %21 = vector.load %arg3[%c0_14, %c0_15] : memref<16x128xf32, #tpu.memory_space<vmem>>, vector<1x128xf32>
    %22 = vector.broadcast %21 : vector<1x128xf32> to vector<64x128xf32>
    %23 = arith.addf %20, %22 : vector<64x128xf32>
    %cst_16 = arith.constant dense<0.000000e+00> : vector<64x128xf32>
    %24 = tpu.matmul %7, %11, %cst_16 {dimension_numbers = #tpu.dot_dimension_numbers<[1], [0], [0], [1], [0, 0, 1, 1], [], []>} : vector<64x128xf32>, vector<128x128xf32>, vector<64x128xf32> -> vector<64x128xf32>
    %c1_17 = arith.constant 1 : index
    %c0_18 = arith.constant 0 : index
    %25 = vector.load %arg3[%c1_17, %c0_18] : memref<16x128xf32, #tpu.memory_space<vmem>>, vector<1x128xf32>
    %26 = vector.broadcast %25 : vector<1x128xf32> to vector<64x128xf32>
    %27 = arith.addf %24, %26 : vector<64x128xf32>
    %cst_19 = arith.constant dense<0.000000e+00> : vector<64x128xf32>
    %28 = tpu.matmul %7, %13, %cst_19 {dimension_numbers = #tpu.dot_dimension_numbers<[1], [0], [0], [1], [0, 0, 1, 1], [], []>} : vector<64x128xf32>, vector<128x128xf32>, vector<64x128xf32> -> vector<64x128xf32>
    %c2_20 = arith.constant 2 : index
    %c0_21 = arith.constant 0 : index
    %29 = vector.load %arg3[%c2_20, %c0_21] : memref<16x128xf32, #tpu.memory_space<vmem>>, vector<1x128xf32>
    %30 = vector.broadcast %29 : vector<1x128xf32> to vector<64x128xf32>
    %31 = arith.addf %28, %30 : vector<64x128xf32>
    %c3_22 = arith.constant 3 : index
    %c0_23 = arith.constant 0 : index
    %32 = vector.load %arg3[%c3_22, %c0_23] : memref<16x128xf32, #tpu.memory_space<vmem>>, vector<1x128xf32>
    %cst_24 = arith.constant 0.000000e+00 : f32
    %33 = vector.broadcast %cst_24 : f32 to vector<8x128xf32>
    %34 = vector.extract_strided_slice %23 {offsets = [0, 0], sizes = [8, 128], strides = [1, 1]} : vector<64x128xf32> to vector<8x128xf32>
    %cst_25 = arith.constant dense<0.000000e+00> : vector<8x128xf32>
    %35 = tpu.matmul %33, %15, %cst_25 {dimension_numbers = #tpu.dot_dimension_numbers<[1], [0], [0], [1], [0, 0, 1, 1], [], []>} : vector<8x128xf32>, vector<128x128xf32>, vector<8x128xf32> -> vector<8x128xf32>
    %36 = arith.addf %34, %35 : vector<8x128xf32>
    %37 = arith.negf %36 : vector<8x128xf32>
    %38 = math.exp %37 : vector<8x128xf32>
    %cst_26 = arith.constant 1.000000e+00 : f32
    %39 = vector.broadcast %cst_26 : f32 to vector<8x128xf32>
    %40 = arith.addf %39, %38 : vector<8x128xf32>
    %41 = arith.divf %39, %40 : vector<8x128xf32>
    %42 = vector.extract_strided_slice %27 {offsets = [0, 0], sizes = [8, 128], strides = [1, 1]} : vector<64x128xf32> to vector<8x128xf32>
    %cst_27 = arith.constant dense<0.000000e+00> : vector<8x128xf32>
    %43 = tpu.matmul %33, %17, %cst_27 {dimension_numbers = #tpu.dot_dimension_numbers<[1], [0], [0], [1], [0, 0, 1, 1], [], []>} : vector<8x128xf32>, vector<128x128xf32>, vector<8x128xf32> -> vector<8x128xf32>
    %44 = arith.addf %42, %43 : vector<8x128xf32>
    %45 = arith.negf %44 : vector<8x128xf32>
    %46 = math.exp %45 : vector<8x128xf32>
    %cst_28 = arith.constant 1.000000e+00 : f32
    %47 = vector.broadcast %cst_28 : f32 to vector<8x128xf32>
    %48 = arith.addf %47, %46 : vector<8x128xf32>
    %49 = arith.divf %47, %48 : vector<8x128xf32>
    %50 = vector.extract_strided_slice %31 {offsets = [0, 0], sizes = [8, 128], strides = [1, 1]} : vector<64x128xf32> to vector<8x128xf32>
    %cst_29 = arith.constant dense<0.000000e+00> : vector<8x128xf32>
    %51 = tpu.matmul %33, %19, %cst_29 {dimension_numbers = #tpu.dot_dimension_numbers<[1], [0], [0], [1], [0, 0, 1, 1], [], []>} : vector<8x128xf32>, vector<128x128xf32>, vector<8x128xf32> -> vector<8x128xf32>
    %52 = vector.broadcast %32 : vector<1x128xf32> to vector<8x128xf32>
    %53 = arith.addf %51, %52 : vector<8x128xf32>
    %54 = arith.mulf %41, %53 : vector<8x128xf32>
    %55 = arith.addf %50, %54 : vector<8x128xf32>
    %56 = math.tanh %55 : vector<8x128xf32>
    %cst_30 = arith.constant 1.000000e+00 : f32
    %57 = vector.broadcast %cst_30 : f32 to vector<8x128xf32>
    %58 = arith.subf %57, %49 : vector<8x128xf32>
    %59 = arith.mulf %58, %56 : vector<8x128xf32>
    %60 = arith.mulf %49, %33 : vector<8x128xf32>
    %61 = arith.addf %59, %60 : vector<8x128xf32>
    %62 = vector.extract_strided_slice %23 {offsets = [8, 0], sizes = [8, 128], strides = [1, 1]} : vector<64x128xf32> to vector<8x128xf32>
    %cst_31 = arith.constant dense<0.000000e+00> : vector<8x128xf32>
    %63 = tpu.matmul %61, %15, %cst_31 {dimension_numbers = #tpu.dot_dimension_numbers<[1], [0], [0], [1], [0, 0, 1, 1], [], []>} : vector<8x128xf32>, vector<128x128xf32>, vector<8x128xf32> -> vector<8x128xf32>
    %64 = arith.addf %62, %63 : vector<8x128xf32>
    %65 = arith.negf %64 : vector<8x128xf32>
    %66 = math.exp %65 : vector<8x128xf32>
    %cst_32 = arith.constant 1.000000e+00 : f32
    %67 = vector.broadcast %cst_32 : f32 to vector<8x128xf32>
    %68 = arith.addf %67, %66 : vector<8x128xf32>
    %69 = arith.divf %67, %68 : vector<8x128xf32>
    %70 = vector.extract_strided_slice %27 {offsets = [8, 0], sizes = [8, 128], strides = [1, 1]} : vector<64x128xf32> to vector<8x128xf32>
    %cst_33 = arith.constant dense<0.000000e+00> : vector<8x128xf32>
    %71 = tpu.matmul %61, %17, %cst_33 {dimension_numbers = #tpu.dot_dimension_numbers<[1], [0], [0], [1], [0, 0, 1, 1], [], []>} : vector<8x128xf32>, vector<128x128xf32>, vector<8x128xf32> -> vector<8x128xf32>
    %72 = arith.addf %70, %71 : vector<8x128xf32>
    %73 = arith.negf %72 : vector<8x128xf32>
    %74 = math.exp %73 : vector<8x128xf32>
    %cst_34 = arith.constant 1.000000e+00 : f32
    %75 = vector.broadcast %cst_34 : f32 to vector<8x128xf32>
    %76 = arith.addf %75, %74 : vector<8x128xf32>
    %77 = arith.divf %75, %76 : vector<8x128xf32>
    %78 = vector.extract_strided_slice %31 {offsets = [8, 0], sizes = [8, 128], strides = [1, 1]} : vector<64x128xf32> to vector<8x128xf32>
    %cst_35 = arith.constant dense<0.000000e+00> : vector<8x128xf32>
    %79 = tpu.matmul %61, %19, %cst_35 {dimension_numbers = #tpu.dot_dimension_numbers<[1], [0], [0], [1], [0, 0, 1, 1], [], []>} : vector<8x128xf32>, vector<128x128xf32>, vector<8x128xf32> -> vector<8x128xf32>
    %80 = vector.broadcast %32 : vector<1x128xf32> to vector<8x128xf32>
    %81 = arith.addf %79, %80 : vector<8x128xf32>
    %82 = arith.mulf %69, %81 : vector<8x128xf32>
    %83 = arith.addf %78, %82 : vector<8x128xf32>
    %84 = math.tanh %83 : vector<8x128xf32>
    %cst_36 = arith.constant 1.000000e+00 : f32
    %85 = vector.broadcast %cst_36 : f32 to vector<8x128xf32>
    %86 = arith.subf %85, %77 : vector<8x128xf32>
    %87 = arith.mulf %86, %84 : vector<8x128xf32>
    %88 = arith.mulf %77, %61 : vector<8x128xf32>
    %89 = arith.addf %87, %88 : vector<8x128xf32>
    %90 = vector.extract_strided_slice %23 {offsets = [16, 0], sizes = [8, 128], strides = [1, 1]} : vector<64x128xf32> to vector<8x128xf32>
    %cst_37 = arith.constant dense<0.000000e+00> : vector<8x128xf32>
    %91 = tpu.matmul %89, %15, %cst_37 {dimension_numbers = #tpu.dot_dimension_numbers<[1], [0], [0], [1], [0, 0, 1, 1], [], []>} : vector<8x128xf32>, vector<128x128xf32>, vector<8x128xf32> -> vector<8x128xf32>
    %92 = arith.addf %90, %91 : vector<8x128xf32>
    %93 = arith.negf %92 : vector<8x128xf32>
    %94 = math.exp %93 : vector<8x128xf32>
    %cst_38 = arith.constant 1.000000e+00 : f32
    %95 = vector.broadcast %cst_38 : f32 to vector<8x128xf32>
    %96 = arith.addf %95, %94 : vector<8x128xf32>
    %97 = arith.divf %95, %96 : vector<8x128xf32>
    %98 = vector.extract_strided_slice %27 {offsets = [16, 0], sizes = [8, 128], strides = [1, 1]} : vector<64x128xf32> to vector<8x128xf32>
    %cst_39 = arith.constant dense<0.000000e+00> : vector<8x128xf32>
    %99 = tpu.matmul %89, %17, %cst_39 {dimension_numbers = #tpu.dot_dimension_numbers<[1], [0], [0], [1], [0, 0, 1, 1], [], []>} : vector<8x128xf32>, vector<128x128xf32>, vector<8x128xf32> -> vector<8x128xf32>
    %100 = arith.addf %98, %99 : vector<8x128xf32>
    %101 = arith.negf %100 : vector<8x128xf32>
    %102 = math.exp %101 : vector<8x128xf32>
    %cst_40 = arith.constant 1.000000e+00 : f32
    %103 = vector.broadcast %cst_40 : f32 to vector<8x128xf32>
    %104 = arith.addf %103, %102 : vector<8x128xf32>
    %105 = arith.divf %103, %104 : vector<8x128xf32>
    %106 = vector.extract_strided_slice %31 {offsets = [16, 0], sizes = [8, 128], strides = [1, 1]} : vector<64x128xf32> to vector<8x128xf32>
    %cst_41 = arith.constant dense<0.000000e+00> : vector<8x128xf32>
    %107 = tpu.matmul %89, %19, %cst_41 {dimension_numbers = #tpu.dot_dimension_numbers<[1], [0], [0], [1], [0, 0, 1, 1], [], []>} : vector<8x128xf32>, vector<128x128xf32>, vector<8x128xf32> -> vector<8x128xf32>
    %108 = vector.broadcast %32 : vector<1x128xf32> to vector<8x128xf32>
    %109 = arith.addf %107, %108 : vector<8x128xf32>
    %110 = arith.mulf %97, %109 : vector<8x128xf32>
    %111 = arith.addf %106, %110 : vector<8x128xf32>
    %112 = math.tanh %111 : vector<8x128xf32>
    %cst_42 = arith.constant 1.000000e+00 : f32
    %113 = vector.broadcast %cst_42 : f32 to vector<8x128xf32>
    %114 = arith.subf %113, %105 : vector<8x128xf32>
    %115 = arith.mulf %114, %112 : vector<8x128xf32>
    %116 = arith.mulf %105, %89 : vector<8x128xf32>
    %117 = arith.addf %115, %116 : vector<8x128xf32>
    %118 = vector.extract_strided_slice %23 {offsets = [24, 0], sizes = [8, 128], strides = [1, 1]} : vector<64x128xf32> to vector<8x128xf32>
    %cst_43 = arith.constant dense<0.000000e+00> : vector<8x128xf32>
    %119 = tpu.matmul %117, %15, %cst_43 {dimension_numbers = #tpu.dot_dimension_numbers<[1], [0], [0], [1], [0, 0, 1, 1], [], []>} : vector<8x128xf32>, vector<128x128xf32>, vector<8x128xf32> -> vector<8x128xf32>
    %120 = arith.addf %118, %119 : vector<8x128xf32>
    %121 = arith.negf %120 : vector<8x128xf32>
    %122 = math.exp %121 : vector<8x128xf32>
    %cst_44 = arith.constant 1.000000e+00 : f32
    %123 = vector.broadcast %cst_44 : f32 to vector<8x128xf32>
    %124 = arith.addf %123, %122 : vector<8x128xf32>
    %125 = arith.divf %123, %124 : vector<8x128xf32>
    %126 = vector.extract_strided_slice %27 {offsets = [24, 0], sizes = [8, 128], strides = [1, 1]} : vector<64x128xf32> to vector<8x128xf32>
    %cst_45 = arith.constant dense<0.000000e+00> : vector<8x128xf32>
    %127 = tpu.matmul %117, %17, %cst_45 {dimension_numbers = #tpu.dot_dimension_numbers<[1], [0], [0], [1], [0, 0, 1, 1], [], []>} : vector<8x128xf32>, vector<128x128xf32>, vector<8x128xf32> -> vector<8x128xf32>
    %128 = arith.addf %126, %127 : vector<8x128xf32>
    %129 = arith.negf %128 : vector<8x128xf32>
    %130 = math.exp %129 : vector<8x128xf32>
    %cst_46 = arith.constant 1.000000e+00 : f32
    %131 = vector.broadcast %cst_46 : f32 to vector<8x128xf32>
    %132 = arith.addf %131, %130 : vector<8x128xf32>
    %133 = arith.divf %131, %132 : vector<8x128xf32>
    %134 = vector.extract_strided_slice %31 {offsets = [24, 0], sizes = [8, 128], strides = [1, 1]} : vector<64x128xf32> to vector<8x128xf32>
    %cst_47 = arith.constant dense<0.000000e+00> : vector<8x128xf32>
    %135 = tpu.matmul %117, %19, %cst_47 {dimension_numbers = #tpu.dot_dimension_numbers<[1], [0], [0], [1], [0, 0, 1, 1], [], []>} : vector<8x128xf32>, vector<128x128xf32>, vector<8x128xf32> -> vector<8x128xf32>
    %136 = vector.broadcast %32 : vector<1x128xf32> to vector<8x128xf32>
    %137 = arith.addf %135, %136 : vector<8x128xf32>
    %138 = arith.mulf %125, %137 : vector<8x128xf32>
    %139 = arith.addf %134, %138 : vector<8x128xf32>
    %140 = math.tanh %139 : vector<8x128xf32>
    %cst_48 = arith.constant 1.000000e+00 : f32
    %141 = vector.broadcast %cst_48 : f32 to vector<8x128xf32>
    %142 = arith.subf %141, %133 : vector<8x128xf32>
    %143 = arith.mulf %142, %140 : vector<8x128xf32>
    %144 = arith.mulf %133, %117 : vector<8x128xf32>
    %145 = arith.addf %143, %144 : vector<8x128xf32>
    %146 = vector.extract_strided_slice %23 {offsets = [32, 0], sizes = [8, 128], strides = [1, 1]} : vector<64x128xf32> to vector<8x128xf32>
    %cst_49 = arith.constant dense<0.000000e+00> : vector<8x128xf32>
    %147 = tpu.matmul %145, %15, %cst_49 {dimension_numbers = #tpu.dot_dimension_numbers<[1], [0], [0], [1], [0, 0, 1, 1], [], []>} : vector<8x128xf32>, vector<128x128xf32>, vector<8x128xf32> -> vector<8x128xf32>
    %148 = arith.addf %146, %147 : vector<8x128xf32>
    %149 = arith.negf %148 : vector<8x128xf32>
    %150 = math.exp %149 : vector<8x128xf32>
    %cst_50 = arith.constant 1.000000e+00 : f32
    %151 = vector.broadcast %cst_50 : f32 to vector<8x128xf32>
    %152 = arith.addf %151, %150 : vector<8x128xf32>
    %153 = arith.divf %151, %152 : vector<8x128xf32>
    %154 = vector.extract_strided_slice %27 {offsets = [32, 0], sizes = [8, 128], strides = [1, 1]} : vector<64x128xf32> to vector<8x128xf32>
    %cst_51 = arith.constant dense<0.000000e+00> : vector<8x128xf32>
    %155 = tpu.matmul %145, %17, %cst_51 {dimension_numbers = #tpu.dot_dimension_numbers<[1], [0], [0], [1], [0, 0, 1, 1], [], []>} : vector<8x128xf32>, vector<128x128xf32>, vector<8x128xf32> -> vector<8x128xf32>
    %156 = arith.addf %154, %155 : vector<8x128xf32>
    %157 = arith.negf %156 : vector<8x128xf32>
    %158 = math.exp %157 : vector<8x128xf32>
    %cst_52 = arith.constant 1.000000e+00 : f32
    %159 = vector.broadcast %cst_52 : f32 to vector<8x128xf32>
    %160 = arith.addf %159, %158 : vector<8x128xf32>
    %161 = arith.divf %159, %160 : vector<8x128xf32>
    %162 = vector.extract_strided_slice %31 {offsets = [32, 0], sizes = [8, 128], strides = [1, 1]} : vector<64x128xf32> to vector<8x128xf32>
    %cst_53 = arith.constant dense<0.000000e+00> : vector<8x128xf32>
    %163 = tpu.matmul %145, %19, %cst_53 {dimension_numbers = #tpu.dot_dimension_numbers<[1], [0], [0], [1], [0, 0, 1, 1], [], []>} : vector<8x128xf32>, vector<128x128xf32>, vector<8x128xf32> -> vector<8x128xf32>
    %164 = vector.broadcast %32 : vector<1x128xf32> to vector<8x128xf32>
    %165 = arith.addf %163, %164 : vector<8x128xf32>
    %166 = arith.mulf %153, %165 : vector<8x128xf32>
    %167 = arith.addf %162, %166 : vector<8x128xf32>
    %168 = math.tanh %167 : vector<8x128xf32>
    %cst_54 = arith.constant 1.000000e+00 : f32
    %169 = vector.broadcast %cst_54 : f32 to vector<8x128xf32>
    %170 = arith.subf %169, %161 : vector<8x128xf32>
    %171 = arith.mulf %170, %168 : vector<8x128xf32>
    %172 = arith.mulf %161, %145 : vector<8x128xf32>
    %173 = arith.addf %171, %172 : vector<8x128xf32>
    %174 = vector.shape_cast %2 : vector<1x128xi1> to vector<1x128xi1>
    %175 = vector.broadcast %174 : vector<1x128xi1> to vector<8x128xi1>
    %176 = arith.select %175, %173, %145 : vector<8x128xi1>, vector<8x128xf32>
    %177 = vector.extract_strided_slice %23 {offsets = [40, 0], sizes = [8, 128], strides = [1, 1]} : vector<64x128xf32> to vector<8x128xf32>
    %cst_55 = arith.constant dense<0.000000e+00> : vector<8x128xf32>
    %178 = tpu.matmul %176, %15, %cst_55 {dimension_numbers = #tpu.dot_dimension_numbers<[1], [0], [0], [1], [0, 0, 1, 1], [], []>} : vector<8x128xf32>, vector<128x128xf32>, vector<8x128xf32> -> vector<8x128xf32>
    %179 = arith.addf %177, %178 : vector<8x128xf32>
    %180 = arith.negf %179 : vector<8x128xf32>
    %181 = math.exp %180 : vector<8x128xf32>
    %cst_56 = arith.constant 1.000000e+00 : f32
    %182 = vector.broadcast %cst_56 : f32 to vector<8x128xf32>
    %183 = arith.addf %182, %181 : vector<8x128xf32>
    %184 = arith.divf %182, %183 : vector<8x128xf32>
    %185 = vector.extract_strided_slice %27 {offsets = [40, 0], sizes = [8, 128], strides = [1, 1]} : vector<64x128xf32> to vector<8x128xf32>
    %cst_57 = arith.constant dense<0.000000e+00> : vector<8x128xf32>
    %186 = tpu.matmul %176, %17, %cst_57 {dimension_numbers = #tpu.dot_dimension_numbers<[1], [0], [0], [1], [0, 0, 1, 1], [], []>} : vector<8x128xf32>, vector<128x128xf32>, vector<8x128xf32> -> vector<8x128xf32>
    %187 = arith.addf %185, %186 : vector<8x128xf32>
    %188 = arith.negf %187 : vector<8x128xf32>
    %189 = math.exp %188 : vector<8x128xf32>
    %cst_58 = arith.constant 1.000000e+00 : f32
    %190 = vector.broadcast %cst_58 : f32 to vector<8x128xf32>
    %191 = arith.addf %190, %189 : vector<8x128xf32>
    %192 = arith.divf %190, %191 : vector<8x128xf32>
    %193 = vector.extract_strided_slice %31 {offsets = [40, 0], sizes = [8, 128], strides = [1, 1]} : vector<64x128xf32> to vector<8x128xf32>
    %cst_59 = arith.constant dense<0.000000e+00> : vector<8x128xf32>
    %194 = tpu.matmul %176, %19, %cst_59 {dimension_numbers = #tpu.dot_dimension_numbers<[1], [0], [0], [1], [0, 0, 1, 1], [], []>} : vector<8x128xf32>, vector<128x128xf32>, vector<8x128xf32> -> vector<8x128xf32>
    %195 = vector.broadcast %32 : vector<1x128xf32> to vector<8x128xf32>
    %196 = arith.addf %194, %195 : vector<8x128xf32>
    %197 = arith.mulf %184, %196 : vector<8x128xf32>
    %198 = arith.addf %193, %197 : vector<8x128xf32>
    %199 = math.tanh %198 : vector<8x128xf32>
    %cst_60 = arith.constant 1.000000e+00 : f32
    %200 = vector.broadcast %cst_60 : f32 to vector<8x128xf32>
    %201 = arith.subf %200, %192 : vector<8x128xf32>
    %202 = arith.mulf %201, %199 : vector<8x128xf32>
    %203 = arith.mulf %192, %176 : vector<8x128xf32>
    %204 = arith.addf %202, %203 : vector<8x128xf32>
    %205 = vector.shape_cast %2 : vector<1x128xi1> to vector<1x128xi1>
    %206 = vector.broadcast %205 : vector<1x128xi1> to vector<8x128xi1>
    %207 = arith.select %206, %204, %176 : vector<8x128xi1>, vector<8x128xf32>
    %208 = vector.extract_strided_slice %23 {offsets = [48, 0], sizes = [8, 128], strides = [1, 1]} : vector<64x128xf32> to vector<8x128xf32>
    %cst_61 = arith.constant dense<0.000000e+00> : vector<8x128xf32>
    %209 = tpu.matmul %207, %15, %cst_61 {dimension_numbers = #tpu.dot_dimension_numbers<[1], [0], [0], [1], [0, 0, 1, 1], [], []>} : vector<8x128xf32>, vector<128x128xf32>, vector<8x128xf32> -> vector<8x128xf32>
    %210 = arith.addf %208, %209 : vector<8x128xf32>
    %211 = arith.negf %210 : vector<8x128xf32>
    %212 = math.exp %211 : vector<8x128xf32>
    %cst_62 = arith.constant 1.000000e+00 : f32
    %213 = vector.broadcast %cst_62 : f32 to vector<8x128xf32>
    %214 = arith.addf %213, %212 : vector<8x128xf32>
    %215 = arith.divf %213, %214 : vector<8x128xf32>
    %216 = vector.extract_strided_slice %27 {offsets = [48, 0], sizes = [8, 128], strides = [1, 1]} : vector<64x128xf32> to vector<8x128xf32>
    %cst_63 = arith.constant dense<0.000000e+00> : vector<8x128xf32>
    %217 = tpu.matmul %207, %17, %cst_63 {dimension_numbers = #tpu.dot_dimension_numbers<[1], [0], [0], [1], [0, 0, 1, 1], [], []>} : vector<8x128xf32>, vector<128x128xf32>, vector<8x128xf32> -> vector<8x128xf32>
    %218 = arith.addf %216, %217 : vector<8x128xf32>
    %219 = arith.negf %218 : vector<8x128xf32>
    %220 = math.exp %219 : vector<8x128xf32>
    %cst_64 = arith.constant 1.000000e+00 : f32
    %221 = vector.broadcast %cst_64 : f32 to vector<8x128xf32>
    %222 = arith.addf %221, %220 : vector<8x128xf32>
    %223 = arith.divf %221, %222 : vector<8x128xf32>
    %224 = vector.extract_strided_slice %31 {offsets = [48, 0], sizes = [8, 128], strides = [1, 1]} : vector<64x128xf32> to vector<8x128xf32>
    %cst_65 = arith.constant dense<0.000000e+00> : vector<8x128xf32>
    %225 = tpu.matmul %207, %19, %cst_65 {dimension_numbers = #tpu.dot_dimension_numbers<[1], [0], [0], [1], [0, 0, 1, 1], [], []>} : vector<8x128xf32>, vector<128x128xf32>, vector<8x128xf32> -> vector<8x128xf32>
    %226 = vector.broadcast %32 : vector<1x128xf32> to vector<8x128xf32>
    %227 = arith.addf %225, %226 : vector<8x128xf32>
    %228 = arith.mulf %215, %227 : vector<8x128xf32>
    %229 = arith.addf %224, %228 : vector<8x128xf32>
    %230 = math.tanh %229 : vector<8x128xf32>
    %cst_66 = arith.constant 1.000000e+00 : f32
    %231 = vector.broadcast %cst_66 : f32 to vector<8x128xf32>
    %232 = arith.subf %231, %223 : vector<8x128xf32>
    %233 = arith.mulf %232, %230 : vector<8x128xf32>
    %234 = arith.mulf %223, %207 : vector<8x128xf32>
    %235 = arith.addf %233, %234 : vector<8x128xf32>
    %236 = vector.shape_cast %2 : vector<1x128xi1> to vector<1x128xi1>
    %237 = vector.broadcast %236 : vector<1x128xi1> to vector<8x128xi1>
    %238 = arith.select %237, %235, %207 : vector<8x128xi1>, vector<8x128xf32>
    %239 = vector.extract_strided_slice %23 {offsets = [56, 0], sizes = [8, 128], strides = [1, 1]} : vector<64x128xf32> to vector<8x128xf32>
    %cst_67 = arith.constant dense<0.000000e+00> : vector<8x128xf32>
    %240 = tpu.matmul %238, %15, %cst_67 {dimension_numbers = #tpu.dot_dimension_numbers<[1], [0], [0], [1], [0, 0, 1, 1], [], []>} : vector<8x128xf32>, vector<128x128xf32>, vector<8x128xf32> -> vector<8x128xf32>
    %241 = arith.addf %239, %240 : vector<8x128xf32>
    %242 = arith.negf %241 : vector<8x128xf32>
    %243 = math.exp %242 : vector<8x128xf32>
    %cst_68 = arith.constant 1.000000e+00 : f32
    %244 = vector.broadcast %cst_68 : f32 to vector<8x128xf32>
    %245 = arith.addf %244, %243 : vector<8x128xf32>
    %246 = arith.divf %244, %245 : vector<8x128xf32>
    %247 = vector.extract_strided_slice %27 {offsets = [56, 0], sizes = [8, 128], strides = [1, 1]} : vector<64x128xf32> to vector<8x128xf32>
    %cst_69 = arith.constant dense<0.000000e+00> : vector<8x128xf32>
    %248 = tpu.matmul %238, %17, %cst_69 {dimension_numbers = #tpu.dot_dimension_numbers<[1], [0], [0], [1], [0, 0, 1, 1], [], []>} : vector<8x128xf32>, vector<128x128xf32>, vector<8x128xf32> -> vector<8x128xf32>
    %249 = arith.addf %247, %248 : vector<8x128xf32>
    %250 = arith.negf %249 : vector<8x128xf32>
    %251 = math.exp %250 : vector<8x128xf32>
    %cst_70 = arith.constant 1.000000e+00 : f32
    %252 = vector.broadcast %cst_70 : f32 to vector<8x128xf32>
    %253 = arith.addf %252, %251 : vector<8x128xf32>
    %254 = arith.divf %252, %253 : vector<8x128xf32>
    %255 = vector.extract_strided_slice %31 {offsets = [56, 0], sizes = [8, 128], strides = [1, 1]} : vector<64x128xf32> to vector<8x128xf32>
    %cst_71 = arith.constant dense<0.000000e+00> : vector<8x128xf32>
    %256 = tpu.matmul %238, %19, %cst_71 {dimension_numbers = #tpu.dot_dimension_numbers<[1], [0], [0], [1], [0, 0, 1, 1], [], []>} : vector<8x128xf32>, vector<128x128xf32>, vector<8x128xf32> -> vector<8x128xf32>
    %257 = vector.broadcast %32 : vector<1x128xf32> to vector<8x128xf32>
    %258 = arith.addf %256, %257 : vector<8x128xf32>
    %259 = arith.mulf %246, %258 : vector<8x128xf32>
    %260 = arith.addf %255, %259 : vector<8x128xf32>
    %261 = math.tanh %260 : vector<8x128xf32>
    %cst_72 = arith.constant 1.000000e+00 : f32
    %262 = vector.broadcast %cst_72 : f32 to vector<8x128xf32>
    %263 = arith.subf %262, %254 : vector<8x128xf32>
    %264 = arith.mulf %263, %261 : vector<8x128xf32>
    %265 = arith.mulf %254, %238 : vector<8x128xf32>
    %266 = arith.addf %264, %265 : vector<8x128xf32>
    %267 = vector.shape_cast %2 : vector<1x128xi1> to vector<1x128xi1>
    %268 = vector.broadcast %267 : vector<1x128xi1> to vector<8x128xi1>
    %269 = arith.select %268, %266, %238 : vector<8x128xi1>, vector<8x128xf32>
    %c6 = arith.constant 6 : index
    %c0_73 = arith.constant 0 : index
    %c0_74 = arith.constant 0 : index
    %270 = vector.load %arg2[%c6, %c0_73, %c0_74] : memref<10x128x128xf32, #tpu.memory_space<vmem>>, vector<1x128x128xf32>
    %271 = vector.shape_cast %270 : vector<1x128x128xf32> to vector<128x128xf32>
    %c7 = arith.constant 7 : index
    %c0_75 = arith.constant 0 : index
    %c0_76 = arith.constant 0 : index
    %272 = vector.load %arg2[%c7, %c0_75, %c0_76] : memref<10x128x128xf32, #tpu.memory_space<vmem>>, vector<1x128x128xf32>
    %273 = vector.shape_cast %272 : vector<1x128x128xf32> to vector<128x128xf32>
    %c4_77 = arith.constant 4 : index
    %c0_78 = arith.constant 0 : index
    %274 = vector.load %arg3[%c4_77, %c0_78] : memref<16x128xf32, #tpu.memory_space<vmem>>, vector<1x128xf32>
    %c5_79 = arith.constant 5 : index
    %c0_80 = arith.constant 0 : index
    %275 = vector.load %arg3[%c5_79, %c0_80] : memref<16x128xf32, #tpu.memory_space<vmem>>, vector<1x128xf32>
    %c6_81 = arith.constant 6 : index
    %c0_82 = arith.constant 0 : index
    %276 = vector.load %arg3[%c6_81, %c0_82] : memref<16x128xf32, #tpu.memory_space<vmem>>, vector<1x128xf32>
    %c7_83 = arith.constant 7 : index
    %c0_84 = arith.constant 0 : index
    %277 = vector.load %arg3[%c7_83, %c0_84] : memref<16x128xf32, #tpu.memory_space<vmem>>, vector<1x128xf32>
    %cst_85 = arith.constant dense<0.000000e+00> : vector<8x128xf32>
    %278 = tpu.matmul %269, %271, %cst_85 {dimension_numbers = #tpu.dot_dimension_numbers<[1], [0], [0], [1], [0, 0, 1, 1], [], []>} : vector<8x128xf32>, vector<128x128xf32>, vector<8x128xf32> -> vector<8x128xf32>
    %279 = vector.broadcast %274 : vector<1x128xf32> to vector<8x128xf32>
    %280 = arith.addf %278, %279 : vector<8x128xf32>
    %281 = vector.broadcast %4 : vector<1x128xf32> to vector<8x128xf32>
    %282 = arith.mulf %280, %281 : vector<8x128xf32>
    %cst_86 = arith.constant dense<0.000000e+00> : vector<8xf32>
    %283 = vector.multi_reduction <add>, %282, %cst_86 [1] : vector<8x128xf32> to vector<8xf32>
    %284 = vector.shape_cast %283 : vector<8xf32> to vector<8x1xf32>
    %cst_87 = arith.constant 3.125000e-02 : f32
    %285 = vector.broadcast %cst_87 : f32 to vector<8x1xf32>
    %286 = arith.mulf %284, %285 : vector<8x1xf32>
    %287 = vector.broadcast %286 : vector<8x1xf32> to vector<8x128xf32>
    %288 = arith.subf %280, %287 : vector<8x128xf32>
    %289 = vector.broadcast %4 : vector<1x128xf32> to vector<8x128xf32>
    %290 = arith.mulf %288, %289 : vector<8x128xf32>
    %291 = arith.mulf %290, %290 : vector<8x128xf32>
    %cst_88 = arith.constant dense<0.000000e+00> : vector<8xf32>
    %292 = vector.multi_reduction <add>, %291, %cst_88 [1] : vector<8x128xf32> to vector<8xf32>
    %293 = vector.shape_cast %292 : vector<8xf32> to vector<8x1xf32>
    %cst_89 = arith.constant 3.125000e-02 : f32
    %294 = vector.broadcast %cst_89 : f32 to vector<8x1xf32>
    %295 = arith.mulf %293, %294 : vector<8x1xf32>
    %cst_90 = arith.constant 9.99999974E-6 : f32
    %296 = vector.broadcast %cst_90 : f32 to vector<8x1xf32>
    %297 = arith.addf %295, %296 : vector<8x1xf32>
    %298 = math.rsqrt %297 : vector<8x1xf32>
    %299 = vector.broadcast %298 : vector<8x1xf32> to vector<8x128xf32>
    %300 = arith.mulf %290, %299 : vector<8x128xf32>
    %301 = vector.broadcast %275 : vector<1x128xf32> to vector<8x128xf32>
    %302 = arith.mulf %300, %301 : vector<8x128xf32>
    %303 = vector.broadcast %276 : vector<1x128xf32> to vector<8x128xf32>
    %304 = arith.addf %302, %303 : vector<8x128xf32>
    %305 = arith.negf %304 : vector<8x128xf32>
    %306 = math.exp %305 : vector<8x128xf32>
    %cst_91 = arith.constant 1.000000e+00 : f32
    %307 = vector.broadcast %cst_91 : f32 to vector<8x128xf32>
    %308 = arith.addf %307, %306 : vector<8x128xf32>
    %309 = arith.divf %307, %308 : vector<8x128xf32>
    %310 = arith.mulf %304, %309 : vector<8x128xf32>
    %cst_92 = arith.constant dense<0.000000e+00> : vector<8x128xf32>
    %311 = tpu.matmul %310, %273, %cst_92 {dimension_numbers = #tpu.dot_dimension_numbers<[1], [0], [0], [1], [0, 0, 1, 1], [], []>} : vector<8x128xf32>, vector<128x128xf32>, vector<8x128xf32> -> vector<8x128xf32>
    %312 = vector.broadcast %277 : vector<1x128xf32> to vector<8x128xf32>
    %313 = arith.addf %311, %312 : vector<8x128xf32>
    %c8 = arith.constant 8 : index
    %c0_93 = arith.constant 0 : index
    %c0_94 = arith.constant 0 : index
    %314 = vector.load %arg2[%c8, %c0_93, %c0_94] : memref<10x128x128xf32, #tpu.memory_space<vmem>>, vector<1x128x128xf32>
    %315 = vector.shape_cast %314 : vector<1x128x128xf32> to vector<128x128xf32>
    %c9 = arith.constant 9 : index
    %c0_95 = arith.constant 0 : index
    %c0_96 = arith.constant 0 : index
    %316 = vector.load %arg2[%c9, %c0_95, %c0_96] : memref<10x128x128xf32, #tpu.memory_space<vmem>>, vector<1x128x128xf32>
    %317 = vector.shape_cast %316 : vector<1x128x128xf32> to vector<128x128xf32>
    %c8_97 = arith.constant 8 : index
    %c0_98 = arith.constant 0 : index
    %318 = vector.load %arg3[%c8_97, %c0_98] : memref<16x128xf32, #tpu.memory_space<vmem>>, vector<1x128xf32>
    %c9_99 = arith.constant 9 : index
    %c0_100 = arith.constant 0 : index
    %319 = vector.load %arg3[%c9_99, %c0_100] : memref<16x128xf32, #tpu.memory_space<vmem>>, vector<1x128xf32>
    %c10 = arith.constant 10 : index
    %c0_101 = arith.constant 0 : index
    %320 = vector.load %arg3[%c10, %c0_101] : memref<16x128xf32, #tpu.memory_space<vmem>>, vector<1x128xf32>
    %c11 = arith.constant 11 : index
    %c0_102 = arith.constant 0 : index
    %321 = vector.load %arg3[%c11, %c0_102] : memref<16x128xf32, #tpu.memory_space<vmem>>, vector<1x128xf32>
    %cst_103 = arith.constant dense<0.000000e+00> : vector<8x128xf32>
    %322 = tpu.matmul %269, %315, %cst_103 {dimension_numbers = #tpu.dot_dimension_numbers<[1], [0], [0], [1], [0, 0, 1, 1], [], []>} : vector<8x128xf32>, vector<128x128xf32>, vector<8x128xf32> -> vector<8x128xf32>
    %323 = vector.broadcast %318 : vector<1x128xf32> to vector<8x128xf32>
    %324 = arith.addf %322, %323 : vector<8x128xf32>
    %325 = vector.broadcast %4 : vector<1x128xf32> to vector<8x128xf32>
    %326 = arith.mulf %324, %325 : vector<8x128xf32>
    %cst_104 = arith.constant dense<0.000000e+00> : vector<8xf32>
    %327 = vector.multi_reduction <add>, %326, %cst_104 [1] : vector<8x128xf32> to vector<8xf32>
    %328 = vector.shape_cast %327 : vector<8xf32> to vector<8x1xf32>
    %cst_105 = arith.constant 3.125000e-02 : f32
    %329 = vector.broadcast %cst_105 : f32 to vector<8x1xf32>
    %330 = arith.mulf %328, %329 : vector<8x1xf32>
    %331 = vector.broadcast %330 : vector<8x1xf32> to vector<8x128xf32>
    %332 = arith.subf %324, %331 : vector<8x128xf32>
    %333 = vector.broadcast %4 : vector<1x128xf32> to vector<8x128xf32>
    %334 = arith.mulf %332, %333 : vector<8x128xf32>
    %335 = arith.mulf %334, %334 : vector<8x128xf32>
    %cst_106 = arith.constant dense<0.000000e+00> : vector<8xf32>
    %336 = vector.multi_reduction <add>, %335, %cst_106 [1] : vector<8x128xf32> to vector<8xf32>
    %337 = vector.shape_cast %336 : vector<8xf32> to vector<8x1xf32>
    %cst_107 = arith.constant 3.125000e-02 : f32
    %338 = vector.broadcast %cst_107 : f32 to vector<8x1xf32>
    %339 = arith.mulf %337, %338 : vector<8x1xf32>
    %cst_108 = arith.constant 9.99999974E-6 : f32
    %340 = vector.broadcast %cst_108 : f32 to vector<8x1xf32>
    %341 = arith.addf %339, %340 : vector<8x1xf32>
    %342 = math.rsqrt %341 : vector<8x1xf32>
    %343 = vector.broadcast %342 : vector<8x1xf32> to vector<8x128xf32>
    %344 = arith.mulf %334, %343 : vector<8x128xf32>
    %345 = vector.broadcast %319 : vector<1x128xf32> to vector<8x128xf32>
    %346 = arith.mulf %344, %345 : vector<8x128xf32>
    %347 = vector.broadcast %320 : vector<1x128xf32> to vector<8x128xf32>
    %348 = arith.addf %346, %347 : vector<8x128xf32>
    %349 = arith.negf %348 : vector<8x128xf32>
    %350 = math.exp %349 : vector<8x128xf32>
    %cst_109 = arith.constant 1.000000e+00 : f32
    %351 = vector.broadcast %cst_109 : f32 to vector<8x128xf32>
    %352 = arith.addf %351, %350 : vector<8x128xf32>
    %353 = arith.divf %351, %352 : vector<8x128xf32>
    %354 = arith.mulf %348, %353 : vector<8x128xf32>
    %cst_110 = arith.constant dense<0.000000e+00> : vector<8x128xf32>
    %355 = tpu.matmul %354, %317, %cst_110 {dimension_numbers = #tpu.dot_dimension_numbers<[1], [0], [0], [1], [0, 0, 1, 1], [], []>} : vector<8x128xf32>, vector<128x128xf32>, vector<8x128xf32> -> vector<8x128xf32>
    %356 = vector.broadcast %321 : vector<1x128xf32> to vector<8x128xf32>
    %357 = arith.addf %355, %356 : vector<8x128xf32>
    %358 = arith.negf %313 : vector<8x128xf32>
    %359 = math.exp %358 : vector<8x128xf32>
    %cst_111 = arith.constant 1.000000e+00 : f32
    %360 = vector.broadcast %cst_111 : f32 to vector<8x128xf32>
    %361 = arith.addf %360, %359 : vector<8x128xf32>
    %362 = arith.divf %360, %361 : vector<8x128xf32>
    %cst_112 = arith.constant 0xFF800000 : f32
    %363 = vector.shape_cast %6 : vector<1x128xi1> to vector<1x128xi1>
    %364 = vector.broadcast %363 : vector<1x128xi1> to vector<8x128xi1>
    %365 = vector.broadcast %cst_112 : f32 to vector<8x128xf32>
    %366 = arith.select %364, %357, %365 : vector<8x128xi1>, vector<8x128xf32>
    %cst_113 = arith.constant dense<0xFF800000> : vector<8xf32>
    %367 = vector.multi_reduction <maximumf>, %366, %cst_113 [1] : vector<8x128xf32> to vector<8xf32>
    %368 = vector.shape_cast %367 : vector<8xf32> to vector<8x1xf32>
    %369 = vector.broadcast %368 : vector<8x1xf32> to vector<8x128xf32>
    %370 = arith.subf %357, %369 : vector<8x128xf32>
    %cst_114 = arith.constant 0xFF800000 : f32
    %371 = vector.shape_cast %6 : vector<1x128xi1> to vector<1x128xi1>
    %372 = vector.broadcast %371 : vector<1x128xi1> to vector<8x128xi1>
    %373 = vector.broadcast %cst_114 : f32 to vector<8x128xf32>
    %374 = arith.select %372, %370, %373 : vector<8x128xi1>, vector<8x128xf32>
    %375 = math.exp %374 : vector<8x128xf32>
    %cst_115 = arith.constant dense<0.000000e+00> : vector<8xf32>
    %376 = vector.multi_reduction <add>, %375, %cst_115 [1] : vector<8x128xf32> to vector<8xf32>
    %377 = vector.shape_cast %376 : vector<8xf32> to vector<8x1xf32>
    %378 = vector.broadcast %377 : vector<8x1xf32> to vector<8x128xf32>
    %379 = arith.divf %375, %378 : vector<8x128xf32>
    %c0_116 = arith.constant 0 : index
    %c0_117 = arith.constant 0 : index
    %380 = vector.load %arg4[%c0_116, %c0_117] : memref<8x256xf32, #tpu.memory_space<vmem>>, vector<8x128xf32>
    tpu.vector_store %arg4[%c0_116, %c0_117], %362 {strides = array<i32>} : memref<8x256xf32, #tpu.memory_space<vmem>>, vector<8x128xf32>,
    %c0_118 = arith.constant 0 : index
    %c128 = arith.constant 128 : index
    %381 = vector.load %arg4[%c0_118, %c128] : memref<8x256xf32, #tpu.memory_space<vmem>>, vector<8x128xf32>
    tpu.vector_store %arg4[%c0_118, %c128], %379 {strides = array<i32>} : memref<8x256xf32, #tpu.memory_space<vmem>>, vector<8x128xf32>,
    return
  }
  func.func @transform_0(%arg0: i32) -> (i32, i32) {
    %c0_i32 = arith.constant 0 : i32
    %c0_i32_0 = arith.constant 0 : i32
    %c0_i32_1 = arith.constant 0 : i32
    return %c0_i32, %c0_i32_0 : i32, i32
  }
  func.func @transform_1(%arg0: i32) -> (i32, i32, i32) {
    %c0_i32 = arith.constant 0 : i32
    %c0_i32_0 = arith.constant 0 : i32
    %c0_i32_1 = arith.constant 0 : i32
    %c0_i32_2 = arith.constant 0 : i32
    return %c0_i32, %c0_i32_0, %c0_i32_1 : i32, i32, i32
  }
  func.func @transform_2(%arg0: i32) -> (i32, i32) {
    %c0_i32 = arith.constant 0 : i32
    %c0_i32_0 = arith.constant 0 : i32
    %c0_i32_1 = arith.constant 0 : i32
    return %c0_i32, %c0_i32_0 : i32, i32
  }
  func.func @transform_3(%arg0: i32) -> (i32, i32) {
    %c0_i32 = arith.constant 0 : i32
    %c0_i32_0 = arith.constant 0 : i32
    %c0_i32_1 = arith.constant 0 : i32
    return %c0_i32, %c0_i32_0 : i32, i32
  }
}

</mosaic_0001>

<llo_original>
// kernel: portfolio_gru_with_prob_forward.1
$region0: #{portfolio_gru_with_prob_forward.1}
  #allocation0 [shape = 'u32[]', space=smem, size = 0x4, offset = 0x4, fixed_abs, tag = 'smem constant byte address 0x4 - core index']
  #allocation1 [shape = 'u32[72,128]{1,0:T(1,128)}', space=vmem, size = 0x9000, scoped, tag = 'internal scratch']
  #allocation2 [shape = 'f32[64,128]{1,0:T(8,128)}', space=vmem, size = 0x8000, scoped, tag = 'scratch operand']
  %s0 = inlined_call_operand.vmem [shape: f32[64,128], index: 0, kind: input, shape index: {}]
  %s1 = inlined_call_operand.hbm [shape: f32[10,128,128], index: 1, kind: input, shape index: {}]
  %s2 = inlined_call_operand.vmem [shape: f32[16,128], index: 2, kind: input, shape index: {}]
  %s3 = inlined_call_operand.vmem [shape: f32[8,256], index: 3, kind: output, shape index: {}]
  %s4 = sld [smem:[#allocation0]]
  $region26: #{portfolio_gru_with_prob_forward.1} parent=0
    _
  %s6 = ssub.s32 1, %s4
  %s7 = scalar_select 0, %s6, %s4
  $region1: #{portfolio_gru_with_prob_forward.1} parent=0
    #allocation3 [shape = 'u8[655360]{0}', space=vmem, size = 0xa0000, scoped, tag = 'input window, operand 1, single buffered']
    #allocation4 [shape = 's32[1]{0}', space=sflag, size = 0x4, scoped, tag = 'scoped memory for portfolio_gru_with_prob_forward.1']
    %8 = vsyncpa [#allocation4], 0
    // Predicated region
    $region2: #{portfolio_gru_with_prob_forward.1} parent=1 // pred_check
      _
    $region3: #{portfolio_gru_with_prob_forward.1} parent=1 // pred_check_branch
      %10 = sbr.rel (0) target = $region5
    $region4: #{portfolio_gru_with_prob_forward.1} parent=1 // pred_region
      _
    $region5: #{portfolio_gru_with_prob_forward.1} parent=1 // pred_fallthru
      _
    // Predicated region
    $region6: #{portfolio_gru_with_prob_forward.1} parent=1 // pred_check
      _
    $region7: #{portfolio_gru_with_prob_forward.1} parent=1 // pred_check_branch
      %12 = sbr.rel (0) target = $region9
    $region8: #{portfolio_gru_with_prob_forward.1} parent=1 // pred_region
      %14 = vsyncadd [#allocation4], 0
      %s15 = sshll.u32 %s1, 4
      %s16 = int_to_ptr.hbm [resolvable:$true] %s15
      %s17 = sshll.u32 [#allocation3], 4
      %s18 = int_to_ptr.vmem [resolvable:$true] %s17
      %23 = dma.hbm_to_vmem [thread:$0]  %s16, 20480, %s18, [#allocation4], 128, 128, 8
    $region9: #{portfolio_gru_with_prob_forward.1} parent=1 // pred_fallthru
      _
    // Predicated region
    $region10: #{portfolio_gru_with_prob_forward.1} parent=1 // pred_check
      _
    $region11: #{portfolio_gru_with_prob_forward.1} parent=1 // pred_check_branch
      %25 = sbr.rel (0) target = $region13
    $region12: #{portfolio_gru_with_prob_forward.1} parent=1 // pred_region
      _
    $region13: #{portfolio_gru_with_prob_forward.1} parent=1 // pred_fallthru
      _
    // Predicated region
    $region14: #{portfolio_gru_with_prob_forward.1} parent=1 // pred_check
      _
    $region15: #{portfolio_gru_with_prob_forward.1} parent=1 // pred_check_branch
      %27 = sbr.rel (0) target = $region17
    $region16: #{portfolio_gru_with_prob_forward.1} parent=1 // pred_region
      %29 = dma.done [#allocation4], 20480
    $region17: #{portfolio_gru_with_prob_forward.1} parent=1 // pred_fallthru
      _
    %v30 = vlaneseq
    %v31 = vand.u32 %v30, 127
    %vm32 = vcmp.lt.s32.totalorder %v31, 32
    %v33 = vsel %vm32, 1, 0
    %v34 = vcvt.s32.f32 %v33
    %vm35 = vcmp.lt.s32.totalorder %v31, 20
    %v36 = vld [vmem:[%s0] sm:$0xff]
    %v37 = vld [vmem:[%s0 + $0x8] sm:$0xff]
    %v38 = vld [vmem:[%s0 + $0x10] sm:$0xff]
    %v39 = vld [vmem:[%s0 + $0x18] sm:$0xff]
    %v40 = vld [vmem:[%s0 + $0x20] sm:$0xff]
    %v41 = vld [vmem:[%s0 + $0x28] sm:$0xff]
    %v42 = vld [vmem:[%s0 + $0x30] sm:$0xff]
    %v43 = vld [vmem:[%s0 + $0x38] sm:$0xff]
    %v44 = vld [vmem:[#allocation3] sm:$0xff]
    %v45 = vld [vmem:[#allocation3 + $0x8] sm:$0xff]
    %v46 = vld [vmem:[#allocation3 + $0x10] sm:$0xff]
    %v47 = vld [vmem:[#allocation3 + $0x18] sm:$0xff]
    %v48 = vld [vmem:[#allocation3 + $0x20] sm:$0xff]
    %v49 = vld [vmem:[#allocation3 + $0x28] sm:$0xff]
    %v50 = vld [vmem:[#allocation3 + $0x30] sm:$0xff]
    %v51 = vld [vmem:[#allocation3 + $0x38] sm:$0xff]
    %v52 = vld [vmem:[#allocation3 + $0x40] sm:$0xff]
    %v53 = vld [vmem:[#allocation3 + $0x48] sm:$0xff]
    %v54 = vld [vmem:[#allocation3 + $0x50] sm:$0xff]
    %v55 = vld [vmem:[#allocation3 + $0x58] sm:$0xff]
    %v56 = vld [vmem:[#allocation3 + $0x60] sm:$0xff]
    %v57 = vld [vmem:[#allocation3 + $0x68] sm:$0xff]
    %v58 = vld [vmem:[#allocation3 + $0x70] sm:$0xff]
    %v59 = vld [vmem:[#allocation3 + $0x78] sm:$0xff]
    %s60 = scalar_lea.vmem [#allocation3], 128
    %v61 = vld [vmem:[%s60] sm:$0xff]
    %v62 = vld [vmem:[%s60 + $0x8] sm:$0xff]
    %v63 = vld [vmem:[%s60 + $0x10] sm:$0xff]
    %v64 = vld [vmem:[%s60 + $0x18] sm:$0xff]
    %v65 = vld [vmem:[%s60 + $0x20] sm:$0xff]
    %v66 = vld [vmem:[%s60 + $0x28] sm:$0xff]
    %v67 = vld [vmem:[%s60 + $0x30] sm:$0xff]
    %v68 = vld [vmem:[%s60 + $0x38] sm:$0xff]
    %v69 = vld [vmem:[%s60 + $0x40] sm:$0xff]
    %v70 = vld [vmem:[%s60 + $0x48] sm:$0xff]
    %v71 = vld [vmem:[%s60 + $0x50] sm:$0xff]
    %v72 = vld [vmem:[%s60 + $0x58] sm:$0xff]
    %v73 = vld [vmem:[%s60 + $0x60] sm:$0xff]
    %v74 = vld [vmem:[%s60 + $0x68] sm:$0xff]
    %v75 = vld [vmem:[%s60 + $0x70] sm:$0xff]
    %v76 = vld [vmem:[%s60 + $0x78] sm:$0xff]
    %s77 = scalar_lea.vmem [#allocation3], 256
    %v78 = vld [vmem:[%s77] sm:$0xff]
    %v79 = vld [vmem:[%s77 + $0x8] sm:$0xff]
    %v80 = vld [vmem:[%s77 + $0x10] sm:$0xff]
    %v81 = vld [vmem:[%s77 + $0x18] sm:$0xff]
    %v82 = vld [vmem:[%s77 + $0x20] sm:$0xff]
    %v83 = vld [vmem:[%s77 + $0x28] sm:$0xff]
    %v84 = vld [vmem:[%s77 + $0x30] sm:$0xff]
    %v85 = vld [vmem:[%s77 + $0x38] sm:$0xff]
    %v86 = vld [vmem:[%s77 + $0x40] sm:$0xff]
    %v87 = vld [vmem:[%s77 + $0x48] sm:$0xff]
    %v88 = vld [vmem:[%s77 + $0x50] sm:$0xff]
    %v89 = vld [vmem:[%s77 + $0x58] sm:$0xff]
    %v90 = vld [vmem:[%s77 + $0x60] sm:$0xff]
    %v91 = vld [vmem:[%s77 + $0x68] sm:$0xff]
    %v92 = vld [vmem:[%s77 + $0x70] sm:$0xff]
    %v93 = vld [vmem:[%s77 + $0x78] sm:$0xff]
    %s94 = scalar_lea.vmem [#allocation3], 384
    %v95 = vld [vmem:[%s94] sm:$0xff]
    %v96 = vld [vmem:[%s94 + $0x8] sm:$0xff]
    %v97 = vld [vmem:[%s94 + $0x10] sm:$0xff]
    %v98 = vld [vmem:[%s94 + $0x18] sm:$0xff]
    %v99 = vld [vmem:[%s94 + $0x20] sm:$0xff]
    %v100 = vld [vmem:[%s94 + $0x28] sm:$0xff]
    %v101 = vld [vmem:[%s94 + $0x30] sm:$0xff]
    %v102 = vld [vmem:[%s94 + $0x38] sm:$0xff]
    %v103 = vld [vmem:[%s94 + $0x40] sm:$0xff]
    %v104 = vld [vmem:[%s94 + $0x48] sm:$0xff]
    %v105 = vld [vmem:[%s94 + $0x50] sm:$0xff]
    %v106 = vld [vmem:[%s94 + $0x58] sm:$0xff]
    %v107 = vld [vmem:[%s94 + $0x60] sm:$0xff]
    %v108 = vld [vmem:[%s94 + $0x68] sm:$0xff]
    %v109 = vld [vmem:[%s94 + $0x70] sm:$0xff]
    %v110 = vld [vmem:[%s94 + $0x78] sm:$0xff]
    %s111 = scalar_lea.vmem [#allocation3], 512
    %v112 = vld [vmem:[%s111] sm:$0xff]
    %v113 = vld [vmem:[%s111 + $0x8] sm:$0xff]
    %v114 = vld [vmem:[%s111 + $0x10] sm:$0xff]
    %v115 = vld [vmem:[%s111 + $0x18] sm:$0xff]
    %v116 = vld [vmem:[%s111 + $0x20] sm:$0xff]
    %v117 = vld [vmem:[%s111 + $0x28] sm:$0xff]
    %v118 = vld [vmem:[%s111 + $0x30] sm:$0xff]
    %v119 = vld [vmem:[%s111 + $0x38] sm:$0xff]
    %v120 = vld [vmem:[%s111 + $0x40] sm:$0xff]
    %v121 = vld [vmem:[%s111 + $0x48] sm:$0xff]
    %v122 = vld [vmem:[%s111 + $0x50] sm:$0xff]
    %v123 = vld [vmem:[%s111 + $0x58] sm:$0xff]
    %v124 = vld [vmem:[%s111 + $0x60] sm:$0xff]
    %v125 = vld [vmem:[%s111 + $0x68] sm:$0xff]
    %v126 = vld [vmem:[%s111 + $0x70] sm:$0xff]
    %v127 = vld [vmem:[%s111 + $0x78] sm:$0xff]
    %s128 = scalar_lea.vmem [#allocation3], 640
    %v129 = vld [vmem:[%s128] sm:$0xff]
    %v130 = vld [vmem:[%s128 + $0x8] sm:$0xff]
    %v131 = vld [vmem:[%s128 + $0x10] sm:$0xff]
    %v132 = vld [vmem:[%s128 + $0x18] sm:$0xff]
    %v133 = vld [vmem:[%s128 + $0x20] sm:$0xff]
    %v134 = vld [vmem:[%s128 + $0x28] sm:$0xff]
    %v135 = vld [vmem:[%s128 + $0x30] sm:$0xff]
    %v136 = vld [vmem:[%s128 + $0x38] sm:$0xff]
    %v137 = vld [vmem:[%s128 + $0x40] sm:$0xff]
    %v138 = vld [vmem:[%s128 + $0x48] sm:$0xff]
    %v139 = vld [vmem:[%s128 + $0x50] sm:$0xff]
    %v140 = vld [vmem:[%s128 + $0x58] sm:$0xff]
    %v141 = vld [vmem:[%s128 + $0x60] sm:$0xff]
    %v142 = vld [vmem:[%s128 + $0x68] sm:$0xff]
    %v143 = vld [vmem:[%s128 + $0x70] sm:$0xff]
    %v144 = vld [vmem:[%s128 + $0x78] sm:$0xff]
    %v145 = vld [vmem:[%s2] sm:$0x1]
    %v146 = vperm.slane %v145, 0
    %147 = vmatpush.msra.mxu0 %v59
    %148 = vmatpush.msra.mxu0 %v58
    %149 = vmatpush.msra.mxu0 %v57
    %150 = vmatpush.msra.mxu0 %v56
    %151 = vmatpush.msra.mxu0 %v55
    %152 = vmatpush.msra.mxu0 %v54
    %153 = vmatpush.msra.mxu0 %v53
    %154 = vmatpush.msra.mxu0 %v52
    %155 = vmatpush.msra.mxu0 %v51
    %156 = vmatpush.msra.mxu0 %v50
    %157 = vmatpush.msra.mxu0 %v49
    %158 = vmatpush.msra.mxu0 %v48
    %159 = vmatpush.msra.mxu0 %v47
    %160 = vmatpush.msra.mxu0 %v46
    %161 = vmatpush.msra.mxu0 %v45
    %162 = vmatpush.msra.mxu0 %v44
    %163 = vmatmul.f32.gmra.mxu0 %v36
    %v164 = vpop.f32.mrf.mxu0
    %v165 = vadd.f32 %v146, %v164
    %166 = vmatmul.f32.gmra.mxu0 %v37
    %v167 = vpop.f32.mrf.mxu0
    %v168 = vadd.f32 %v146, %v167
    %169 = vmatmul.f32.gmra.mxu0 %v38
    %v170 = vpop.f32.mrf.mxu0
    %v171 = vadd.f32 %v146, %v170
    %172 = vmatmul.f32.gmra.mxu0 %v39
    %v173 = vpop.f32.mrf.mxu0
    %v174 = vadd.f32 %v146, %v173
    %175 = vmatmul.f32.gmra.mxu0 %v40
    %v176 = vpop.f32.mrf.mxu0
    %v177 = vadd.f32 %v146, %v176
    %178 = vmatmul.f32.gmra.mxu0 %v41
    %v179 = vpop.f32.mrf.mxu0
    %v180 = vadd.f32 %v146, %v179
    %181 = vmatmul.f32.gmra.mxu0 %v42
    %v182 = vpop.f32.mrf.mxu0
    %v183 = vadd.f32 %v146, %v182
    %184 = vmatmul.f32.gmra.mxu0 %v43
    %v185 = vpop.f32.mrf.mxu0
    %v186 = vadd.f32 %v146, %v185
    %187 = vdwg.mxu0
    %v188 = vld [vmem:[%s2 + $0x1] sm:$0x1]
    %v189 = vperm.slane %v188, 0
    %190 = vmatpush.msra.mxu0 %v76
    %191 = vmatpush.msra.mxu0 %v75
    %192 = vmatpush.msra.mxu0 %v74
    %193 = vmatpush.msra.mxu0 %v73
    %194 = vmatpush.msra.mxu0 %v72
    %195 = vmatpush.msra.mxu0 %v71
    %196 = vmatpush.msra.mxu0 %v70
    %197 = vmatpush.msra.mxu0 %v69
    %198 = vmatpush.msra.mxu0 %v68
    %199 = vmatpush.msra.mxu0 %v67
    %200 = vmatpush.msra.mxu0 %v66
    %201 = vmatpush.msra.mxu0 %v65
    %202 = vmatpush.msra.mxu0 %v64
    %203 = vmatpush.msra.mxu0 %v63
    %204 = vmatpush.msra.mxu0 %v62
    %205 = vmatpush.msra.mxu0 %v61
    %206 = vmatmul.f32.gmra.mxu0 %v36
    %v207 = vpop.f32.mrf.mxu0
    %v208 = vadd.f32 %v189, %v207
    %209 = vmatmul.f32.gmra.mxu0 %v37
    %v210 = vpop.f32.mrf.mxu0
    %v211 = vadd.f32 %v189, %v210
    %212 = vmatmul.f32.gmra.mxu0 %v38
    %v213 = vpop.f32.mrf.mxu0
    %v214 = vadd.f32 %v189, %v213
    %215 = vmatmul.f32.gmra.mxu0 %v39
    %v216 = vpop.f32.mrf.mxu0
    %v217 = vadd.f32 %v189, %v216
    %218 = vmatmul.f32.gmra.mxu0 %v40
    %v219 = vpop.f32.mrf.mxu0
    %v220 = vadd.f32 %v189, %v219
    %221 = vmatmul.f32.gmra.mxu0 %v41
    %v222 = vpop.f32.mrf.mxu0
    %v223 = vadd.f32 %v189, %v222
    %224 = vmatmul.f32.gmra.mxu0 %v42
    %v225 = vpop.f32.mrf.mxu0
    %v226 = vadd.f32 %v189, %v225
    %227 = vmatmul.f32.gmra.mxu0 %v43
    %v228 = vpop.f32.mrf.mxu0
    %v229 = vadd.f32 %v189, %v228
    %230 = vdwg.mxu0
    %v231 = vld [vmem:[%s2 + $0x2] sm:$0x1]
    %v232 = vperm.slane %v231, 0
    %233 = vmatpush.msra.mxu0 %v93
    %234 = vmatpush.msra.mxu0 %v92
    %235 = vmatpush.msra.mxu0 %v91
    %236 = vmatpush.msra.mxu0 %v90
    %237 = vmatpush.msra.mxu0 %v89
    %238 = vmatpush.msra.mxu0 %v88
    %239 = vmatpush.msra.mxu0 %v87
    %240 = vmatpush.msra.mxu0 %v86
    %241 = vmatpush.msra.mxu0 %v85
    %242 = vmatpush.msra.mxu0 %v84
    %243 = vmatpush.msra.mxu0 %v83
    %244 = vmatpush.msra.mxu0 %v82
    %245 = vmatpush.msra.mxu0 %v81
    %246 = vmatpush.msra.mxu0 %v80
    %247 = vmatpush.msra.mxu0 %v79
    %248 = vmatpush.msra.mxu0 %v78
    %249 = vmatmul.f32.gmra.mxu0 %v36
    %v250 = vpop.f32.mrf.mxu0
    %v251 = vadd.f32 %v232, %v250
    %252 = vmatmul.f32.gmra.mxu0 %v37
    %v253 = vpop.f32.mrf.mxu0
    %v254 = vadd.f32 %v232, %v253
    %255 = vmatmul.f32.gmra.mxu0 %v38
    %v256 = vpop.f32.mrf.mxu0
    %v257 = vadd.f32 %v232, %v256
    %258 = vmatmul.f32.gmra.mxu0 %v39
    %v259 = vpop.f32.mrf.mxu0
    %v260 = vadd.f32 %v232, %v259
    %261 = vmatmul.f32.gmra.mxu0 %v40
    %v262 = vpop.f32.mrf.mxu0
    %v263 = vadd.f32 %v232, %v262
    %264 = vmatmul.f32.gmra.mxu0 %v41
    %v265 = vpop.f32.mrf.mxu0
    %v266 = vadd.f32 %v232, %v265
    %267 = vmatmul.f32.gmra.mxu0 %v42
    %v268 = vpop.f32.mrf.mxu0
    %v269 = vadd.f32 %v232, %v268
    %270 = vmatmul.f32.gmra.mxu0 %v43
    %v271 = vpop.f32.mrf.mxu0
    %v272 = vadd.f32 %v232, %v271
    %273 = vdwg.mxu0
    %v274 = vld [vmem:[%s2 + $0x3] sm:$0x1]
    %275 = vmatpush.msra.mxu0 %v110
    %276 = vmatpush.msra.mxu0 %v109
    %277 = vmatpush.msra.mxu0 %v108
    %278 = vmatpush.msra.mxu0 %v107
    %279 = vmatpush.msra.mxu0 %v106
    %280 = vmatpush.msra.mxu0 %v105
    %281 = vmatpush.msra.mxu0 %v104
    %282 = vmatpush.msra.mxu0 %v103
    %283 = vmatpush.msra.mxu0 %v102
    %284 = vmatpush.msra.mxu0 %v101
    %285 = vmatpush.msra.mxu0 %v100
    %286 = vmatpush.msra.mxu0 %v99
    %287 = vmatpush.msra.mxu0 %v98
    %288 = vmatpush.msra.mxu0 %v97
    %289 = vmatpush.msra.mxu0 %v96
    %290 = vmatpush.msra.mxu0 %v95
    %291 = vmatmul.f32.gmra.mxu0 0.0
    %v292 = vpop.f32.mrf.mxu0
    %v293 = vadd.f32 0.0, %v292
    %294 = vdwg.mxu0
    %v295 = vadd.f32 %v165, %v293
    %v296 = vxor.u32 %v295, 2147483648
    %v297 = vmul.f32 %v296, 1.442695
    %v298 = vpow.pop %v297
    %v299 = vadd.f32 %v298, 1.0
    %v300 = vrcp.pop %v299
    %v301 = vmul.f32 %v299, %v300
    %v302 = vsub.f32 1.0, %v301
    %v303 = vmul.f32 %v300, %v302
    %v304 = vadd.f32 %v300, %v303
    %vm305 = vweird.f32 %v299
    %vm306 = vweird.f32 %v300
    %vm307 = vmor %vm305, %vm306
    %v308 = vsel %vm307, %v300, %v304
    %v309 = vand.u32 2147483647, %v299
    %vm310 = vcmp.eq.f32.partialorder %v309, 8.507059e+37
    %v311 = vand.u32 %v299, 2147483648
    %v312 = vor.u32 1.1754944e-38, %v311
    %v313 = vsel %vm310, %v312, %v308
    %v314 = vmul.f32 1.0, %v313
    %315 = vmatpush.msra.mxu0 %v127
    %316 = vmatpush.msra.mxu0 %v126
    %317 = vmatpush.msra.mxu0 %v125
    %318 = vmatpush.msra.mxu0 %v124
    %319 = vmatpush.msra.mxu0 %v123
    %320 = vmatpush.msra.mxu0 %v122
    %321 = vmatpush.msra.mxu0 %v121
    %322 = vmatpush.msra.mxu0 %v120
    %323 = vmatpush.msra.mxu0 %v119
    %324 = vmatpush.msra.mxu0 %v118
    %325 = vmatpush.msra.mxu0 %v117
    %326 = vmatpush.msra.mxu0 %v116
    %327 = vmatpush.msra.mxu0 %v115
    %328 = vmatpush.msra.mxu0 %v114
    %329 = vmatpush.msra.mxu0 %v113
    %330 = vmatpush.msra.mxu0 %v112
    %331 = vmatmul.f32.gmra.mxu0 0.0
    %v332 = vpop.f32.mrf.mxu0
    %v333 = vadd.f32 0.0, %v332
    %334 = vdwg.mxu0
    %v335 = vadd.f32 %v208, %v333
    %v336 = vxor.u32 %v335, 2147483648
    %v337 = vmul.f32 %v336, 1.442695
    %v338 = vpow.pop %v337
    %v339 = vadd.f32 %v338, 1.0
    %v340 = vrcp.pop %v339
    %v341 = vmul.f32 %v339, %v340
    %v342 = vsub.f32 1.0, %v341
    %v343 = vmul.f32 %v340, %v342
    %v344 = vadd.f32 %v340, %v343
    %vm345 = vweird.f32 %v339
    %vm346 = vweird.f32 %v340
    %vm347 = vmor %vm345, %vm346
    %v348 = vsel %vm347, %v340, %v344
    %v349 = vand.u32 2147483647, %v339
    %vm350 = vcmp.eq.f32.partialorder %v349, 8.507059e+37
    %v351 = vand.u32 %v339, 2147483648
    %v352 = vor.u32 1.1754944e-38, %v351
    %v353 = vsel %vm350, %v352, %v348
    %v354 = vmul.f32 1.0, %v353
    %v355 = vperm.slane %v274, 0
    %356 = vmatpush.msra.mxu0 %v144
    %357 = vmatpush.msra.mxu0 %v143
    %358 = vmatpush.msra.mxu0 %v142
    %359 = vmatpush.msra.mxu0 %v141
    %360 = vmatpush.msra.mxu0 %v140
    %361 = vmatpush.msra.mxu0 %v139
    %362 = vmatpush.msra.mxu0 %v138
    %363 = vmatpush.msra.mxu0 %v137
    %364 = vmatpush.msra.mxu0 %v136
    %365 = vmatpush.msra.mxu0 %v135
    %366 = vmatpush.msra.mxu0 %v134
    %367 = vmatpush.msra.mxu0 %v133
    %368 = vmatpush.msra.mxu0 %v132
    %369 = vmatpush.msra.mxu0 %v131
    %370 = vmatpush.msra.mxu0 %v130
    %371 = vmatpush.msra.mxu0 %v129
    %372 = vmatmul.f32.gmra.mxu0 0.0
    %v373 = vpop.f32.mrf.mxu0
    %v374 = vadd.f32 %v355, %v373
    %375 = vdwg.mxu0
    %v376 = vmul.f32 %v314, %v374
    %v377 = vadd.f32 %v251, %v376
    %v378 = vtanh.pop %v377
    %v379 = vsub.f32 1.0, %v354
    %v380 = vmul.f32 %v379, %v378
    %v381 = vmul.f32 %v354, 0.0
    %v382 = vadd.f32 %v380, %v381
    %383 = vmatpush.msra.mxu0 %v110
    %384 = vmatpush.msra.mxu0 %v109
    %385 = vmatpush.msra.mxu0 %v108
    %386 = vmatpush.msra.mxu0 %v107
    %387 = vmatpush.msra.mxu0 %v106
    %388 = vmatpush.msra.mxu0 %v105
    %389 = vmatpush.msra.mxu0 %v104
    %390 = vmatpush.msra.mxu0 %v103
    %391 = vmatpush.msra.mxu0 %v102
    %392 = vmatpush.msra.mxu0 %v101
    %393 = vmatpush.msra.mxu0 %v100
    %394 = vmatpush.msra.mxu0 %v99
    %395 = vmatpush.msra.mxu0 %v98
    %396 = vmatpush.msra.mxu0 %v97
    %397 = vmatpush.msra.mxu0 %v96
    %398 = vmatpush.msra.mxu0 %v95
    %399 = vmatmul.f32.gmra.mxu0 %v382
    %v400 = vpop.f32.mrf.mxu0
    %v401 = vadd.f32 0.0, %v400
    %402 = vdwg.mxu0
    %v403 = vadd.f32 %v168, %v401
    %v404 = vxor.u32 %v403, 2147483648
    %v405 = vmul.f32 %v404, 1.442695
    %v406 = vpow.pop %v405
    %v407 = vadd.f32 %v406, 1.0
    %v408 = vrcp.pop %v407
    %v409 = vmul.f32 %v407, %v408
    %v410 = vsub.f32 1.0, %v409
    %v411 = vmul.f32 %v408, %v410
    %v412 = vadd.f32 %v408, %v411
    %vm413 = vweird.f32 %v407
    %vm414 = vweird.f32 %v408
    %vm415 = vmor %vm413, %vm414
    %v416 = vsel %vm415, %v408, %v412
    %v417 = vand.u32 2147483647, %v407
    %vm418 = vcmp.eq.f32.partialorder %v417, 8.507059e+37
    %v419 = vand.u32 %v407, 2147483648
    %v420 = vor.u32 1.1754944e-38, %v419
    %v421 = vsel %vm418, %v420, %v416
    %v422 = vmul.f32 1.0, %v421
    %423 = vmatpush.msra.mxu0 %v127
    %424 = vmatpush.msra.mxu0 %v126
    %425 = vmatpush.msra.mxu0 %v125
    %426 = vmatpush.msra.mxu0 %v124
    %427 = vmatpush.msra.mxu0 %v123
    %428 = vmatpush.msra.mxu0 %v122
    %429 = vmatpush.msra.mxu0 %v121
    %430 = vmatpush.msra.mxu0 %v120
    %431 = vmatpush.msra.mxu0 %v119
    %432 = vmatpush.msra.mxu0 %v118
    %433 = vmatpush.msra.mxu0 %v117
    %434 = vmatpush.msra.mxu0 %v116
    %435 = vmatpush.msra.mxu0 %v115
    %436 = vmatpush.msra.mxu0 %v114
    %437 = vmatpush.msra.mxu0 %v113
    %438 = vmatpush.msra.mxu0 %v112
    %439 = vmatmul.f32.gmra.mxu0 %v382
    %v440 = vpop.f32.mrf.mxu0
    %v441 = vadd.f32 0.0, %v440
    %442 = vdwg.mxu0
    %v443 = vadd.f32 %v211, %v441
    %v444 = vxor.u32 %v443, 2147483648
    %v445 = vmul.f32 %v444, 1.442695
    %v446 = vpow.pop %v445
    %v447 = vadd.f32 %v446, 1.0
    %v448 = vrcp.pop %v447
    %v449 = vmul.f32 %v447, %v448
    %v450 = vsub.f32 1.0, %v449
    %v451 = vmul.f32 %v448, %v450
    %v452 = vadd.f32 %v448, %v451
    %vm453 = vweird.f32 %v447
    %vm454 = vweird.f32 %v448
    %vm455 = vmor %vm453, %vm454
    %v456 = vsel %vm455, %v448, %v452
    %v457 = vand.u32 2147483647, %v447
    %vm458 = vcmp.eq.f32.partialorder %v457, 8.507059e+37
    %v459 = vand.u32 %v447, 2147483648
    %v460 = vor.u32 1.1754944e-38, %v459
    %v461 = vsel %vm458, %v460, %v456
    %v462 = vmul.f32 1.0, %v461
    %463 = vmatpush.msra.mxu0 %v144
    %464 = vmatpush.msra.mxu0 %v143
    %465 = vmatpush.msra.mxu0 %v142
    %466 = vmatpush.msra.mxu0 %v141
    %467 = vmatpush.msra.mxu0 %v140
    %468 = vmatpush.msra.mxu0 %v139
    %469 = vmatpush.msra.mxu0 %v138
    %470 = vmatpush.msra.mxu0 %v137
    %471 = vmatpush.msra.mxu0 %v136
    %472 = vmatpush.msra.mxu0 %v135
    %473 = vmatpush.msra.mxu0 %v134
    %474 = vmatpush.msra.mxu0 %v133
    %475 = vmatpush.msra.mxu0 %v132
    %476 = vmatpush.msra.mxu0 %v131
    %477 = vmatpush.msra.mxu0 %v130
    %478 = vmatpush.msra.mxu0 %v129
    %479 = vmatmul.f32.gmra.mxu0 %v382
    %v480 = vpop.f32.mrf.mxu0
    %v481 = vadd.f32 %v355, %v480
    %482 = vdwg.mxu0
    %v483 = vmul.f32 %v422, %v481
    %v484 = vadd.f32 %v254, %v483
    %v485 = vtanh.pop %v484
    %v486 = vsub.f32 1.0, %v462
    %v487 = vmul.f32 %v486, %v485
    %v488 = vmul.f32 %v462, %v382
    %v489 = vadd.f32 %v487, %v488
    %490 = vmatpush.msra.mxu0 %v110
    %491 = vmatpush.msra.mxu0 %v109
    %492 = vmatpush.msra.mxu0 %v108
    %493 = vmatpush.msra.mxu0 %v107
    %494 = vmatpush.msra.mxu0 %v106
    %495 = vmatpush.msra.mxu0 %v105
    %496 = vmatpush.msra.mxu0 %v104
    %497 = vmatpush.msra.mxu0 %v103
    %498 = vmatpush.msra.mxu0 %v102
    %499 = vmatpush.msra.mxu0 %v101
    %500 = vmatpush.msra.mxu0 %v100
    %501 = vmatpush.msra.mxu0 %v99
    %502 = vmatpush.msra.mxu0 %v98
    %503 = vmatpush.msra.mxu0 %v97
    %504 = vmatpush.msra.mxu0 %v96
    %505 = vmatpush.msra.mxu0 %v95
    %506 = vmatmul.f32.gmra.mxu0 %v489
    %v507 = vpop.f32.mrf.mxu0
    %v508 = vadd.f32 0.0, %v507
    %509 = vdwg.mxu0
    %v510 = vadd.f32 %v171, %v508
    %v511 = vxor.u32 %v510, 2147483648
    %v512 = vmul.f32 %v511, 1.442695
    %v513 = vpow.pop %v512
    %v514 = vadd.f32 %v513, 1.0
    %v515 = vrcp.pop %v514
    %v516 = vmul.f32 %v514, %v515
    %v517 = vsub.f32 1.0, %v516
    %v518 = vmul.f32 %v515, %v517
    %v519 = vadd.f32 %v515, %v518
    %vm520 = vweird.f32 %v514
    %vm521 = vweird.f32 %v515
    %vm522 = vmor %vm520, %vm521
    %v523 = vsel %vm522, %v515, %v519
    %v524 = vand.u32 2147483647, %v514
    %vm525 = vcmp.eq.f32.partialorder %v524, 8.507059e+37
    %v526 = vand.u32 %v514, 2147483648
    %v527 = vor.u32 1.1754944e-38, %v526
    %v528 = vsel %vm525, %v527, %v523
    %v529 = vmul.f32 1.0, %v528
    %530 = vmatpush.msra.mxu0 %v127
    %531 = vmatpush.msra.mxu0 %v126
    %532 = vmatpush.msra.mxu0 %v125
    %533 = vmatpush.msra.mxu0 %v124
    %534 = vmatpush.msra.mxu0 %v123
    %535 = vmatpush.msra.mxu0 %v122
    %536 = vmatpush.msra.mxu0 %v121
    %537 = vmatpush.msra.mxu0 %v120
    %538 = vmatpush.msra.mxu0 %v119
    %539 = vmatpush.msra.mxu0 %v118
    %540 = vmatpush.msra.mxu0 %v117
    %541 = vmatpush.msra.mxu0 %v116
    %542 = vmatpush.msra.mxu0 %v115
    %543 = vmatpush.msra.mxu0 %v114
    %544 = vmatpush.msra.mxu0 %v113
    %545 = vmatpush.msra.mxu0 %v112
    %546 = vmatmul.f32.gmra.mxu0 %v489
    %v547 = vpop.f32.mrf.mxu0
    %v548 = vadd.f32 0.0, %v547
    %549 = vdwg.mxu0
    %v550 = vadd.f32 %v214, %v548
    %v551 = vxor.u32 %v550, 2147483648
    %v552 = vmul.f32 %v551, 1.442695
    %v553 = vpow.pop %v552
    %v554 = vadd.f32 %v553, 1.0
    %v555 = vrcp.pop %v554
    %v556 = vmul.f32 %v554, %v555
    %v557 = vsub.f32 1.0, %v556
    %v558 = vmul.f32 %v555, %v557
    %v559 = vadd.f32 %v555, %v558
    %vm560 = vweird.f32 %v554
    %vm561 = vweird.f32 %v555
    %vm562 = vmor %vm560, %vm561
    %v563 = vsel %vm562, %v555, %v559
    %v564 = vand.u32 2147483647, %v554
    %vm565 = vcmp.eq.f32.partialorder %v564, 8.507059e+37
    %v566 = vand.u32 %v554, 2147483648
    %v567 = vor.u32 1.1754944e-38, %v566
    %v568 = vsel %vm565, %v567, %v563
    %v569 = vmul.f32 1.0, %v568
    %570 = vmatpush.msra.mxu0 %v144
    %571 = vmatpush.msra.mxu0 %v143
    %572 = vmatpush.msra.mxu0 %v142
    %573 = vmatpush.msra.mxu0 %v141
    %574 = vmatpush.msra.mxu0 %v140
    %575 = vmatpush.msra.mxu0 %v139
    %576 = vmatpush.msra.mxu0 %v138
    %577 = vmatpush.msra.mxu0 %v137
    %578 = vmatpush.msra.mxu0 %v136
    %579 = vmatpush.msra.mxu0 %v135
    %580 = vmatpush.msra.mxu0 %v134
    %581 = vmatpush.msra.mxu0 %v133
    %582 = vmatpush.msra.mxu0 %v132
    %583 = vmatpush.msra.mxu0 %v131
    %584 = vmatpush.msra.mxu0 %v130
    %585 = vmatpush.msra.mxu0 %v129
    %586 = vmatmul.f32.gmra.mxu0 %v489
    %v587 = vpop.f32.mrf.mxu0
    %v588 = vadd.f32 %v355, %v587
    %589 = vdwg.mxu0
    %v590 = vmul.f32 %v529, %v588
    %v591 = vadd.f32 %v257, %v590
    %v592 = vtanh.pop %v591
    %v593 = vsub.f32 1.0, %v569
    %v594 = vmul.f32 %v593, %v592
    %v595 = vmul.f32 %v569, %v489
    %v596 = vadd.f32 %v594, %v595
    %597 = vmatpush.msra.mxu0 %v110
    %598 = vmatpush.msra.mxu0 %v109
    %599 = vmatpush.msra.mxu0 %v108
    %600 = vmatpush.msra.mxu0 %v107
    %601 = vmatpush.msra.mxu0 %v106
    %602 = vmatpush.msra.mxu0 %v105
    %603 = vmatpush.msra.mxu0 %v104
    %604 = vmatpush.msra.mxu0 %v103
    %605 = vmatpush.msra.mxu0 %v102
    %606 = vmatpush.msra.mxu0 %v101
    %607 = vmatpush.msra.mxu0 %v100
    %608 = vmatpush.msra.mxu0 %v99
    %609 = vmatpush.msra.mxu0 %v98
    %610 = vmatpush.msra.mxu0 %v97
    %611 = vmatpush.msra.mxu0 %v96
    %612 = vmatpush.msra.mxu0 %v95
    %613 = vmatmul.f32.gmra.mxu0 %v596
    %v614 = vpop.f32.mrf.mxu0
    %v615 = vadd.f32 0.0, %v614
    %616 = vdwg.mxu0
    %v617 = vadd.f32 %v174, %v615
    %v618 = vxor.u32 %v617, 2147483648
    %v619 = vmul.f32 %v618, 1.442695
    %v620 = vpow.pop %v619
    %v621 = vadd.f32 %v620, 1.0
    %v622 = vrcp.pop %v621
    %v623 = vmul.f32 %v621, %v622
    %v624 = vsub.f32 1.0, %v623
    %v625 = vmul.f32 %v622, %v624
    %v626 = vadd.f32 %v622, %v625
    %vm627 = vweird.f32 %v621
    %vm628 = vweird.f32 %v622
    %vm629 = vmor %vm627, %vm628
    %v630 = vsel %vm629, %v622, %v626
    %v631 = vand.u32 2147483647, %v621
    %vm632 = vcmp.eq.f32.partialorder %v631, 8.507059e+37
    %v633 = vand.u32 %v621, 2147483648
    %v634 = vor.u32 1.1754944e-38, %v633
    %v635 = vsel %vm632, %v634, %v630
    %v636 = vmul.f32 1.0, %v635
    %637 = vmatpush.msra.mxu0 %v127
    %638 = vmatpush.msra.mxu0 %v126
    %639 = vmatpush.msra.mxu0 %v125
    %640 = vmatpush.msra.mxu0 %v124
    %641 = vmatpush.msra.mxu0 %v123
    %642 = vmatpush.msra.mxu0 %v122
    %643 = vmatpush.msra.mxu0 %v121
    %644 = vmatpush.msra.mxu0 %v120
    %645 = vmatpush.msra.mxu0 %v119
    %646 = vmatpush.msra.mxu0 %v118
    %647 = vmatpush.msra.mxu0 %v117
    %648 = vmatpush.msra.mxu0 %v116
    %649 = vmatpush.msra.mxu0 %v115
    %650 = vmatpush.msra.mxu0 %v114
    %651 = vmatpush.msra.mxu0 %v113
    %652 = vmatpush.msra.mxu0 %v112
    %653 = vmatmul.f32.gmra.mxu0 %v596
    %v654 = vpop.f32.mrf.mxu0
    %v655 = vadd.f32 0.0, %v654
    %656 = vdwg.mxu0
    %v657 = vadd.f32 %v217, %v655
    %v658 = vxor.u32 %v657, 2147483648
    %v659 = vmul.f32 %v658, 1.442695
    %v660 = vpow.pop %v659
    %v661 = vadd.f32 %v660, 1.0
    %v662 = vrcp.pop %v661
    %v663 = vmul.f32 %v661, %v662
    %v664 = vsub.f32 1.0, %v663
    %v665 = vmul.f32 %v662, %v664
    %v666 = vadd.f32 %v662, %v665
    %vm667 = vweird.f32 %v661
    %vm668 = vweird.f32 %v662
    %vm669 = vmor %vm667, %vm668
    %v670 = vsel %vm669, %v662, %v666
    %v671 = vand.u32 2147483647, %v661
    %vm672 = vcmp.eq.f32.partialorder %v671, 8.507059e+37
    %v673 = vand.u32 %v661, 2147483648
    %v674 = vor.u32 1.1754944e-38, %v673
    %v675 = vsel %vm672, %v674, %v670
    %v676 = vmul.f32 1.0, %v675
    %677 = vmatpush.msra.mxu0 %v144
    %678 = vmatpush.msra.mxu0 %v143
    %679 = vmatpush.msra.mxu0 %v142
    %680 = vmatpush.msra.mxu0 %v141
    %681 = vmatpush.msra.mxu0 %v140
    %682 = vmatpush.msra.mxu0 %v139
    %683 = vmatpush.msra.mxu0 %v138
    %684 = vmatpush.msra.mxu0 %v137
    %685 = vmatpush.msra.mxu0 %v136
    %686 = vmatpush.msra.mxu0 %v135
    %687 = vmatpush.msra.mxu0 %v134
    %688 = vmatpush.msra.mxu0 %v133
    %689 = vmatpush.msra.mxu0 %v132
    %690 = vmatpush.msra.mxu0 %v131
    %691 = vmatpush.msra.mxu0 %v130
    %692 = vmatpush.msra.mxu0 %v129
    %693 = vmatmul.f32.gmra.mxu0 %v596
    %v694 = vpop.f32.mrf.mxu0
    %v695 = vadd.f32 %v355, %v694
    %696 = vdwg.mxu0
    %v697 = vmul.f32 %v636, %v695
    %v698 = vadd.f32 %v260, %v697
    %v699 = vtanh.pop %v698
    %v700 = vsub.f32 1.0, %v676
    %v701 = vmul.f32 %v700, %v699
    %v702 = vmul.f32 %v676, %v596
    %v703 = vadd.f32 %v701, %v702
    %704 = vmatpush.msra.mxu0 %v110
    %705 = vmatpush.msra.mxu0 %v109
    %706 = vmatpush.msra.mxu0 %v108
    %707 = vmatpush.msra.mxu0 %v107
    %708 = vmatpush.msra.mxu0 %v106
    %709 = vmatpush.msra.mxu0 %v105
    %710 = vmatpush.msra.mxu0 %v104
    %711 = vmatpush.msra.mxu0 %v103
    %712 = vmatpush.msra.mxu0 %v102
    %713 = vmatpush.msra.mxu0 %v101
    %714 = vmatpush.msra.mxu0 %v100
    %715 = vmatpush.msra.mxu0 %v99
    %716 = vmatpush.msra.mxu0 %v98
    %717 = vmatpush.msra.mxu0 %v97
    %718 = vmatpush.msra.mxu0 %v96
    %719 = vmatpush.msra.mxu0 %v95
    %720 = vmatmul.f32.gmra.mxu0 %v703
    %v721 = vpop.f32.mrf.mxu0
    %v722 = vadd.f32 0.0, %v721
    %723 = vdwg.mxu0
    %v724 = vadd.f32 %v177, %v722
    %v725 = vxor.u32 %v724, 2147483648
    %v726 = vmul.f32 %v725, 1.442695
    %v727 = vpow.pop %v726
    %v728 = vadd.f32 %v727, 1.0
    %v729 = vrcp.pop %v728
    %v730 = vmul.f32 %v728, %v729
    %v731 = vsub.f32 1.0, %v730
    %v732 = vmul.f32 %v729, %v731
    %v733 = vadd.f32 %v729, %v732
    %vm734 = vweird.f32 %v728
    %vm735 = vweird.f32 %v729
    %vm736 = vmor %vm734, %vm735
    %v737 = vsel %vm736, %v729, %v733
    %v738 = vand.u32 2147483647, %v728
    %vm739 = vcmp.eq.f32.partialorder %v738, 8.507059e+37
    %v740 = vand.u32 %v728, 2147483648
    %v741 = vor.u32 1.1754944e-38, %v740
    %v742 = vsel %vm739, %v741, %v737
    %v743 = vmul.f32 1.0, %v742
    %744 = vmatpush.msra.mxu0 %v127
    %745 = vmatpush.msra.mxu0 %v126
    %746 = vmatpush.msra.mxu0 %v125
    %747 = vmatpush.msra.mxu0 %v124
    %748 = vmatpush.msra.mxu0 %v123
    %749 = vmatpush.msra.mxu0 %v122
    %750 = vmatpush.msra.mxu0 %v121
    %751 = vmatpush.msra.mxu0 %v120
    %752 = vmatpush.msra.mxu0 %v119
    %753 = vmatpush.msra.mxu0 %v118
    %754 = vmatpush.msra.mxu0 %v117
    %755 = vmatpush.msra.mxu0 %v116
    %756 = vmatpush.msra.mxu0 %v115
    %757 = vmatpush.msra.mxu0 %v114
    %758 = vmatpush.msra.mxu0 %v113
    %759 = vmatpush.msra.mxu0 %v112
    %760 = vmatmul.f32.gmra.mxu0 %v703
    %v761 = vpop.f32.mrf.mxu0
    %v762 = vadd.f32 0.0, %v761
    %763 = vdwg.mxu0
    %v764 = vadd.f32 %v220, %v762
    %v765 = vxor.u32 %v764, 2147483648
    %v766 = vmul.f32 %v765, 1.442695
    %v767 = vpow.pop %v766
    %v768 = vadd.f32 %v767, 1.0
    %v769 = vrcp.pop %v768
    %v770 = vmul.f32 %v768, %v769
    %v771 = vsub.f32 1.0, %v770
    %v772 = vmul.f32 %v769, %v771
    %v773 = vadd.f32 %v769, %v772
    %vm774 = vweird.f32 %v768
    %vm775 = vweird.f32 %v769
    %vm776 = vmor %vm774, %vm775
    %v777 = vsel %vm776, %v769, %v773
    %v778 = vand.u32 2147483647, %v768
    %vm779 = vcmp.eq.f32.partialorder %v778, 8.507059e+37
    %v780 = vand.u32 %v768, 2147483648
    %v781 = vor.u32 1.1754944e-38, %v780
    %v782 = vsel %vm779, %v781, %v777
    %v783 = vmul.f32 1.0, %v782
    %784 = vmatpush.msra.mxu0 %v144
    %785 = vmatpush.msra.mxu0 %v143
    %786 = vmatpush.msra.mxu0 %v142
    %787 = vmatpush.msra.mxu0 %v141
    %788 = vmatpush.msra.mxu0 %v140
    %789 = vmatpush.msra.mxu0 %v139
    %790 = vmatpush.msra.mxu0 %v138
    %791 = vmatpush.msra.mxu0 %v137
    %792 = vmatpush.msra.mxu0 %v136
    %793 = vmatpush.msra.mxu0 %v135
    %794 = vmatpush.msra.mxu0 %v134
    %795 = vmatpush.msra.mxu0 %v133
    %796 = vmatpush.msra.mxu0 %v132
    %797 = vmatpush.msra.mxu0 %v131
    %798 = vmatpush.msra.mxu0 %v130
    %799 = vmatpush.msra.mxu0 %v129
    %800 = vmatmul.f32.gmra.mxu0 %v703
    %v801 = vpop.f32.mrf.mxu0
    %v802 = vadd.f32 %v355, %v801
    %803 = vdwg.mxu0
    %v804 = vmul.f32 %v743, %v802
    %v805 = vadd.f32 %v263, %v804
    %v806 = vtanh.pop %v805
    %v807 = vsub.f32 1.0, %v783
    %v808 = vmul.f32 %v807, %v806
    %v809 = vmul.f32 %v783, %v703
    %v810 = vadd.f32 %v808, %v809
    %vm811 = vcmp.eq.s32.totalorder %v33, 1
    %v812 = vsel %vm811, %v810, %v703
    %813 = vmatpush.msra.mxu0 %v110
    %814 = vmatpush.msra.mxu0 %v109
    %815 = vmatpush.msra.mxu0 %v108
    %816 = vmatpush.msra.mxu0 %v107
    %817 = vmatpush.msra.mxu0 %v106
    %818 = vmatpush.msra.mxu0 %v105
    %819 = vmatpush.msra.mxu0 %v104
    %820 = vmatpush.msra.mxu0 %v103
    %821 = vmatpush.msra.mxu0 %v102
    %822 = vmatpush.msra.mxu0 %v101
    %823 = vmatpush.msra.mxu0 %v100
    %824 = vmatpush.msra.mxu0 %v99
    %825 = vmatpush.msra.mxu0 %v98
    %826 = vmatpush.msra.mxu0 %v97
    %827 = vmatpush.msra.mxu0 %v96
    %828 = vmatpush.msra.mxu0 %v95
    %829 = vmatmul.f32.gmra.mxu0 %v812
    %v830 = vpop.f32.mrf.mxu0
    %v831 = vadd.f32 0.0, %v830
    %832 = vdwg.mxu0
    %v833 = vadd.f32 %v180, %v831
    %v834 = vxor.u32 %v833, 2147483648
    %v835 = vmul.f32 %v834, 1.442695
    %v836 = vpow.pop %v835
    %v837 = vadd.f32 %v836, 1.0
    %v838 = vrcp.pop %v837
    %v839 = vmul.f32 %v837, %v838
    %v840 = vsub.f32 1.0, %v839
    %v841 = vmul.f32 %v838, %v840
    %v842 = vadd.f32 %v838, %v841
    %vm843 = vweird.f32 %v837
    %vm844 = vweird.f32 %v838
    %vm845 = vmor %vm843, %vm844
    %v846 = vsel %vm845, %v838, %v842
    %v847 = vand.u32 2147483647, %v837
    %vm848 = vcmp.eq.f32.partialorder %v847, 8.507059e+37
    %v849 = vand.u32 %v837, 2147483648
    %v850 = vor.u32 1.1754944e-38, %v849
    %v851 = vsel %vm848, %v850, %v846
    %v852 = vmul.f32 1.0, %v851
    %853 = vmatpush.msra.mxu0 %v127
    %854 = vmatpush.msra.mxu0 %v126
    %855 = vmatpush.msra.mxu0 %v125
    %856 = vmatpush.msra.mxu0 %v124
    %857 = vmatpush.msra.mxu0 %v123
    %858 = vmatpush.msra.mxu0 %v122
    %859 = vmatpush.msra.mxu0 %v121
    %860 = vmatpush.msra.mxu0 %v120
    %861 = vmatpush.msra.mxu0 %v119
    %862 = vmatpush.msra.mxu0 %v118
    %863 = vmatpush.msra.mxu0 %v117
    %864 = vmatpush.msra.mxu0 %v116
    %865 = vmatpush.msra.mxu0 %v115
    %866 = vmatpush.msra.mxu0 %v114
    %867 = vmatpush.msra.mxu0 %v113
    %868 = vmatpush.msra.mxu0 %v112
    %869 = vmatmul.f32.gmra.mxu0 %v812
    %v870 = vpop.f32.mrf.mxu0
    %v871 = vadd.f32 0.0, %v870
    %872 = vdwg.mxu0
    %v873 = vadd.f32 %v223, %v871
    %v874 = vxor.u32 %v873, 2147483648
    %v875 = vmul.f32 %v874, 1.442695
    %v876 = vpow.pop %v875
    %v877 = vadd.f32 %v876, 1.0
    %v878 = vrcp.pop %v877
    %v879 = vmul.f32 %v877, %v878
    %v880 = vsub.f32 1.0, %v879
    %v881 = vmul.f32 %v878, %v880
    %v882 = vadd.f32 %v878, %v881
    %vm883 = vweird.f32 %v877
    %vm884 = vweird.f32 %v878
    %vm885 = vmor %vm883, %vm884
    %v886 = vsel %vm885, %v878, %v882
    %v887 = vand.u32 2147483647, %v877
    %vm888 = vcmp.eq.f32.partialorder %v887, 8.507059e+37
    %v889 = vand.u32 %v877, 2147483648
    %v890 = vor.u32 1.1754944e-38, %v889
    %v891 = vsel %vm888, %v890, %v886
    %v892 = vmul.f32 1.0, %v891
    %893 = vmatpush.msra.mxu0 %v144
    %894 = vmatpush.msra.mxu0 %v143
    %895 = vmatpush.msra.mxu0 %v142
    %896 = vmatpush.msra.mxu0 %v141
    %897 = vmatpush.msra.mxu0 %v140
    %898 = vmatpush.msra.mxu0 %v139
    %899 = vmatpush.msra.mxu0 %v138
    %900 = vmatpush.msra.mxu0 %v137
    %901 = vmatpush.msra.mxu0 %v136
    %902 = vmatpush.msra.mxu0 %v135
    %903 = vmatpush.msra.mxu0 %v134
    %904 = vmatpush.msra.mxu0 %v133
    %905 = vmatpush.msra.mxu0 %v132
    %906 = vmatpush.msra.mxu0 %v131
    %907 = vmatpush.msra.mxu0 %v130
    %908 = vmatpush.msra.mxu0 %v129
    %909 = vmatmul.f32.gmra.mxu0 %v812
    %v910 = vpop.f32.mrf.mxu0
    %v911 = vadd.f32 %v355, %v910
    %912 = vdwg.mxu0
    %v913 = vmul.f32 %v852, %v911
    %v914 = vadd.f32 %v266, %v913
    %v915 = vtanh.pop %v914
    %v916 = vsub.f32 1.0, %v892
    %v917 = vmul.f32 %v916, %v915
    %v918 = vmul.f32 %v892, %v812
    %v919 = vadd.f32 %v917, %v918
    %v920 = vsel %vm811, %v919, %v703
    %921 = vmatpush.msra.mxu0 %v110
    %922 = vmatpush.msra.mxu0 %v109
    %923 = vmatpush.msra.mxu0 %v108
    %924 = vmatpush.msra.mxu0 %v107
    %925 = vmatpush.msra.mxu0 %v106
    %926 = vmatpush.msra.mxu0 %v105
    %927 = vmatpush.msra.mxu0 %v104
    %928 = vmatpush.msra.mxu0 %v103
    %929 = vmatpush.msra.mxu0 %v102
    %930 = vmatpush.msra.mxu0 %v101
    %931 = vmatpush.msra.mxu0 %v100
    %932 = vmatpush.msra.mxu0 %v99
    %933 = vmatpush.msra.mxu0 %v98
    %934 = vmatpush.msra.mxu0 %v97
    %935 = vmatpush.msra.mxu0 %v96
    %936 = vmatpush.msra.mxu0 %v95
    %937 = vmatmul.f32.gmra.mxu0 %v920
    %v938 = vpop.f32.mrf.mxu0
    %v939 = vadd.f32 0.0, %v938
    %940 = vdwg.mxu0
    %v941 = vadd.f32 %v183, %v939
    %v942 = vxor.u32 %v941, 2147483648
    %v943 = vmul.f32 %v942, 1.442695
    %v944 = vpow.pop %v943
    %v945 = vadd.f32 %v944, 1.0
    %v946 = vrcp.pop %v945
    %v947 = vmul.f32 %v945, %v946
    %v948 = vsub.f32 1.0, %v947
    %v949 = vmul.f32 %v946, %v948
    %v950 = vadd.f32 %v946, %v949
    %vm951 = vweird.f32 %v945
    %vm952 = vweird.f32 %v946
    %vm953 = vmor %vm951, %vm952
    %v954 = vsel %vm953, %v946, %v950
    %v955 = vand.u32 2147483647, %v945
    %vm956 = vcmp.eq.f32.partialorder %v955, 8.507059e+37
    %v957 = vand.u32 %v945, 2147483648
    %v958 = vor.u32 1.1754944e-38, %v957
    %v959 = vsel %vm956, %v958, %v954
    %v960 = vmul.f32 1.0, %v959
    %961 = vmatpush.msra.mxu0 %v127
    %962 = vmatpush.msra.mxu0 %v126
    %963 = vmatpush.msra.mxu0 %v125
    %964 = vmatpush.msra.mxu0 %v124
    %965 = vmatpush.msra.mxu0 %v123
    %966 = vmatpush.msra.mxu0 %v122
    %967 = vmatpush.msra.mxu0 %v121
    %968 = vmatpush.msra.mxu0 %v120
    %969 = vmatpush.msra.mxu0 %v119
    %970 = vmatpush.msra.mxu0 %v118
    %971 = vmatpush.msra.mxu0 %v117
    %972 = vmatpush.msra.mxu0 %v116
    %973 = vmatpush.msra.mxu0 %v115
    %974 = vmatpush.msra.mxu0 %v114
    %975 = vmatpush.msra.mxu0 %v113
    %976 = vmatpush.msra.mxu0 %v112
    %977 = vmatmul.f32.gmra.mxu0 %v920
    %v978 = vpop.f32.mrf.mxu0
    %v979 = vadd.f32 0.0, %v978
    %980 = vdwg.mxu0
    %v981 = vadd.f32 %v226, %v979
    %v982 = vxor.u32 %v981, 2147483648
    %v983 = vmul.f32 %v982, 1.442695
    %v984 = vpow.pop %v983
    %v985 = vadd.f32 %v984, 1.0
    %v986 = vrcp.pop %v985
    %v987 = vmul.f32 %v985, %v986
    %v988 = vsub.f32 1.0, %v987
    %v989 = vmul.f32 %v986, %v988
    %v990 = vadd.f32 %v986, %v989
    %vm991 = vweird.f32 %v985
    %vm992 = vweird.f32 %v986
    %vm993 = vmor %vm991, %vm992
    %v994 = vsel %vm993, %v986, %v990
    %v995 = vand.u32 2147483647, %v985
    %vm996 = vcmp.eq.f32.partialorder %v995, 8.507059e+37
    %v997 = vand.u32 %v985, 2147483648
    %v998 = vor.u32 1.1754944e-38, %v997
    %v999 = vsel %vm996, %v998, %v994
    %v1000 = vmul.f32 1.0, %v999
    %1001 = vmatpush.msra.mxu0 %v144
    %1002 = vmatpush.msra.mxu0 %v143
    %1003 = vmatpush.msra.mxu0 %v142
    %1004 = vmatpush.msra.mxu0 %v141
    %1005 = vmatpush.msra.mxu0 %v140
    %1006 = vmatpush.msra.mxu0 %v139
    %1007 = vmatpush.msra.mxu0 %v138
    %1008 = vmatpush.msra.mxu0 %v137
    %1009 = vmatpush.msra.mxu0 %v136
    %1010 = vmatpush.msra.mxu0 %v135
    %1011 = vmatpush.msra.mxu0 %v134
    %1012 = vmatpush.msra.mxu0 %v133
    %1013 = vmatpush.msra.mxu0 %v132
    %1014 = vmatpush.msra.mxu0 %v131
    %1015 = vmatpush.msra.mxu0 %v130
    %1016 = vmatpush.msra.mxu0 %v129
    %1017 = vmatmul.f32.gmra.mxu0 %v920
    %v1018 = vpop.f32.mrf.mxu0
    %v1019 = vadd.f32 %v355, %v1018
    %1020 = vdwg.mxu0
    %v1021 = vmul.f32 %v960, %v1019
    %v1022 = vadd.f32 %v269, %v1021
    %v1023 = vtanh.pop %v1022
    %v1024 = vsub.f32 1.0, %v1000
    %v1025 = vmul.f32 %v1024, %v1023
    %v1026 = vmul.f32 %v1000, %v920
    %v1027 = vadd.f32 %v1025, %v1026
    %v1028 = vsel %vm811, %v1027, %v703
    %1029 = vmatpush.msra.mxu0 %v110
    %1030 = vmatpush.msra.mxu0 %v109
    %1031 = vmatpush.msra.mxu0 %v108
    %1032 = vmatpush.msra.mxu0 %v107
    %1033 = vmatpush.msra.mxu0 %v106
    %1034 = vmatpush.msra.mxu0 %v105
    %1035 = vmatpush.msra.mxu0 %v104
    %1036 = vmatpush.msra.mxu0 %v103
    %1037 = vmatpush.msra.mxu0 %v102
    %1038 = vmatpush.msra.mxu0 %v101
    %1039 = vmatpush.msra.mxu0 %v100
    %1040 = vmatpush.msra.mxu0 %v99
    %1041 = vmatpush.msra.mxu0 %v98
    %1042 = vmatpush.msra.mxu0 %v97
    %1043 = vmatpush.msra.mxu0 %v96
    %1044 = vmatpush.msra.mxu0 %v95
    %1045 = vmatmul.f32.gmra.mxu0 %v1028
    %v1046 = vpop.f32.mrf.mxu0
    %v1047 = vadd.f32 0.0, %v1046
    %1048 = vdwg.mxu0
    %v1049 = vadd.f32 %v186, %v1047
    %v1050 = vxor.u32 %v1049, 2147483648
    %v1051 = vmul.f32 %v1050, 1.442695
    %v1052 = vpow.pop %v1051
    %v1053 = vadd.f32 %v1052, 1.0
    %v1054 = vrcp.pop %v1053
    %v1055 = vmul.f32 %v1053, %v1054
    %v1056 = vsub.f32 1.0, %v1055
    %v1057 = vmul.f32 %v1054, %v1056
    %v1058 = vadd.f32 %v1054, %v1057
    %vm1059 = vweird.f32 %v1053
    %vm1060 = vweird.f32 %v1054
    %vm1061 = vmor %vm1059, %vm1060
    %v1062 = vsel %vm1061, %v1054, %v1058
    %v1063 = vand.u32 2147483647, %v1053
    %vm1064 = vcmp.eq.f32.partialorder %v1063, 8.507059e+37
    %v1065 = vand.u32 %v1053, 2147483648
    %v1066 = vor.u32 1.1754944e-38, %v1065
    %v1067 = vsel %vm1064, %v1066, %v1062
    %v1068 = vmul.f32 1.0, %v1067
    %1069 = vmatpush.msra.mxu0 %v127
    %1070 = vmatpush.msra.mxu0 %v126
    %1071 = vmatpush.msra.mxu0 %v125
    %1072 = vmatpush.msra.mxu0 %v124
    %1073 = vmatpush.msra.mxu0 %v123
    %1074 = vmatpush.msra.mxu0 %v122
    %1075 = vmatpush.msra.mxu0 %v121
    %1076 = vmatpush.msra.mxu0 %v120
    %1077 = vmatpush.msra.mxu0 %v119
    %1078 = vmatpush.msra.mxu0 %v118
    %1079 = vmatpush.msra.mxu0 %v117
    %1080 = vmatpush.msra.mxu0 %v116
    %1081 = vmatpush.msra.mxu0 %v115
    %1082 = vmatpush.msra.mxu0 %v114
    %1083 = vmatpush.msra.mxu0 %v113
    %1084 = vmatpush.msra.mxu0 %v112
    %1085 = vmatmul.f32.gmra.mxu0 %v1028
    %v1086 = vpop.f32.mrf.mxu0
    %v1087 = vadd.f32 0.0, %v1086
    %1088 = vdwg.mxu0
    %v1089 = vadd.f32 %v229, %v1087
    %v1090 = vxor.u32 %v1089, 2147483648
    %v1091 = vmul.f32 %v1090, 1.442695
    %v1092 = vpow.pop %v1091
    %v1093 = vadd.f32 %v1092, 1.0
    %v1094 = vrcp.pop %v1093
    %v1095 = vmul.f32 %v1093, %v1094
    %v1096 = vsub.f32 1.0, %v1095
    %v1097 = vmul.f32 %v1094, %v1096
    %v1098 = vadd.f32 %v1094, %v1097
    %vm1099 = vweird.f32 %v1093
    %vm1100 = vweird.f32 %v1094
    %vm1101 = vmor %vm1099, %vm1100
    %v1102 = vsel %vm1101, %v1094, %v1098
    %v1103 = vand.u32 2147483647, %v1093
    %vm1104 = vcmp.eq.f32.partialorder %v1103, 8.507059e+37
    %v1105 = vand.u32 %v1093, 2147483648
    %v1106 = vor.u32 1.1754944e-38, %v1105
    %v1107 = vsel %vm1104, %v1106, %v1102
    %v1108 = vmul.f32 1.0, %v1107
    %1109 = vmatpush.msra.mxu0 %v144
    %1110 = vmatpush.msra.mxu0 %v143
    %1111 = vmatpush.msra.mxu0 %v142
    %1112 = vmatpush.msra.mxu0 %v141
    %1113 = vmatpush.msra.mxu0 %v140
    %1114 = vmatpush.msra.mxu0 %v139
    %1115 = vmatpush.msra.mxu0 %v138
    %1116 = vmatpush.msra.mxu0 %v137
    %1117 = vmatpush.msra.mxu0 %v136
    %1118 = vmatpush.msra.mxu0 %v135
    %1119 = vmatpush.msra.mxu0 %v134
    %1120 = vmatpush.msra.mxu0 %v133
    %1121 = vmatpush.msra.mxu0 %v132
    %1122 = vmatpush.msra.mxu0 %v131
    %1123 = vmatpush.msra.mxu0 %v130
    %1124 = vmatpush.msra.mxu0 %v129
    %1125 = vmatmul.f32.gmra.mxu0 %v1028
    %v1126 = vpop.f32.mrf.mxu0
    %v1127 = vadd.f32 %v355, %v1126
    %1128 = vdwg.mxu0
    %v1129 = vmul.f32 %v1068, %v1127
    %v1130 = vadd.f32 %v272, %v1129
    %v1131 = vtanh.pop %v1130
    %v1132 = vsub.f32 1.0, %v1108
    %v1133 = vmul.f32 %v1132, %v1131
    %v1134 = vmul.f32 %v1108, %v1028
    %v1135 = vadd.f32 %v1133, %v1134
    %v1136 = vsel %vm811, %v1135, %v703
    %s1137 = scalar_lea.vmem [#allocation3], 768
    %v1138 = vld [vmem:[%s1137] sm:$0xff]
    %v1139 = vld [vmem:[%s1137 + $0x8] sm:$0xff]
    %v1140 = vld [vmem:[%s1137 + $0x10] sm:$0xff]
    %v1141 = vld [vmem:[%s1137 + $0x18] sm:$0xff]
    %v1142 = vld [vmem:[%s1137 + $0x20] sm:$0xff]
    %v1143 = vld [vmem:[%s1137 + $0x28] sm:$0xff]
    %v1144 = vld [vmem:[%s1137 + $0x30] sm:$0xff]
    %v1145 = vld [vmem:[%s1137 + $0x38] sm:$0xff]
    %v1146 = vld [vmem:[%s1137 + $0x40] sm:$0xff]
    %v1147 = vld [vmem:[%s1137 + $0x48] sm:$0xff]
    %v1148 = vld [vmem:[%s1137 + $0x50] sm:$0xff]
    %v1149 = vld [vmem:[%s1137 + $0x58] sm:$0xff]
    %v1150 = vld [vmem:[%s1137 + $0x60] sm:$0xff]
    %v1151 = vld [vmem:[%s1137 + $0x68] sm:$0xff]
    %v1152 = vld [vmem:[%s1137 + $0x70] sm:$0xff]
    %v1153 = vld [vmem:[%s1137 + $0x78] sm:$0xff]
    %s1154 = scalar_lea.vmem [#allocation3], 896
    %v1155 = vld [vmem:[%s1154] sm:$0xff]
    %v1156 = vld [vmem:[%s1154 + $0x8] sm:$0xff]
    %v1157 = vld [vmem:[%s1154 + $0x10] sm:$0xff]
    %v1158 = vld [vmem:[%s1154 + $0x18] sm:$0xff]
    %v1159 = vld [vmem:[%s1154 + $0x20] sm:$0xff]
    %v1160 = vld [vmem:[%s1154 + $0x28] sm:$0xff]
    %v1161 = vld [vmem:[%s1154 + $0x30] sm:$0xff]
    %v1162 = vld [vmem:[%s1154 + $0x38] sm:$0xff]
    %v1163 = vld [vmem:[%s1154 + $0x40] sm:$0xff]
    %v1164 = vld [vmem:[%s1154 + $0x48] sm:$0xff]
    %v1165 = vld [vmem:[%s1154 + $0x50] sm:$0xff]
    %v1166 = vld [vmem:[%s1154 + $0x58] sm:$0xff]
    %v1167 = vld [vmem:[%s1154 + $0x60] sm:$0xff]
    %v1168 = vld [vmem:[%s1154 + $0x68] sm:$0xff]
    %v1169 = vld [vmem:[%s1154 + $0x70] sm:$0xff]
    %v1170 = vld [vmem:[%s1154 + $0x78] sm:$0xff]
    %v1171 = vld [vmem:[%s2 + $0x4] sm:$0x1]
    %v1172 = vld [vmem:[%s2 + $0x5] sm:$0x1]
    %v1173 = vld [vmem:[%s2 + $0x6] sm:$0x1]
    %v1174 = vld [vmem:[%s2 + $0x7] sm:$0x1]
    %v1175 = vperm.slane %v1171, 0
    %1176 = vmatpush.msra.mxu0 %v1153
    %1177 = vmatpush.msra.mxu0 %v1152
    %1178 = vmatpush.msra.mxu0 %v1151
    %1179 = vmatpush.msra.mxu0 %v1150
    %1180 = vmatpush.msra.mxu0 %v1149
    %1181 = vmatpush.msra.mxu0 %v1148
    %1182 = vmatpush.msra.mxu0 %v1147
    %1183 = vmatpush.msra.mxu0 %v1146
    %1184 = vmatpush.msra.mxu0 %v1145
    %1185 = vmatpush.msra.mxu0 %v1144
    %1186 = vmatpush.msra.mxu0 %v1143
    %1187 = vmatpush.msra.mxu0 %v1142
    %1188 = vmatpush.msra.mxu0 %v1141
    %1189 = vmatpush.msra.mxu0 %v1140
    %1190 = vmatpush.msra.mxu0 %v1139
    %1191 = vmatpush.msra.mxu0 %v1138
    %1192 = vmatmul.f32.gmra.mxu0 %v1136
    %v1193 = vpop.f32.mrf.mxu0
    %v1194 = vadd.f32 %v1175, %v1193
    %1195 = vdwg.mxu0
    %v1196 = vmul.f32 %v1194, %v34
    %1197 = vadd.xlane.f32.xlu0 %v1196
    %v1198 = vpop.xlane.xlu0 %1197
    %v1199 = vmul.f32 %v1198, 0.03125
    %v1200 = vsub.f32 %v1194, %v1199
    %v1201 = vmul.f32 %v1200, %v34
    %v1202 = vmul.f32 %v1201, %v1201
    %1203 = vadd.xlane.f32.xlu0 %v1202
    %v1204 = vpop.xlane.xlu0 %1203
    %v1205 = vmul.f32 %v1204, 0.03125
    %v1206 = vadd.f32 %v1205, 1e-05
    %v1207 = vrsqrt.pop %v1206
    %v1208 = vmul.f32 %v1207, %v1206
    %v1209 = vmul.f32 %v1208, %v1207
    %v1210 = vmul.f32 0.5, %v1209
    %v1211 = vsub.f32 1.5, %v1210
    %v1212 = vmul.f32 %v1207, %v1211
    %vm1213 = vweird.f32 %v1206
    %vm1214 = vweird.f32 %v1207
    %vm1215 = vmor %vm1213, %vm1214
    %v1216 = vsel %vm1215, %v1207, %v1212
    %v1217 = vmul.f32 %v1201, %v1216
    %v1218 = vperm.slane %v1172, 0
    %v1219 = vmul.f32 %v1217, %v1218
    %v1220 = vperm.slane %v1173, 0
    %v1221 = vadd.f32 %v1219, %v1220
    %v1222 = vxor.u32 %v1221, 2147483648
    %v1223 = vmul.f32 %v1222, 1.442695
    %v1224 = vpow.pop %v1223
    %v1225 = vadd.f32 %v1224, 1.0
    %v1226 = vrcp.pop %v1225
    %v1227 = vmul.f32 %v1225, %v1226
    %v1228 = vsub.f32 1.0, %v1227
    %v1229 = vmul.f32 %v1226, %v1228
    %v1230 = vadd.f32 %v1226, %v1229
    %vm1231 = vweird.f32 %v1225
    %vm1232 = vweird.f32 %v1226
    %vm1233 = vmor %vm1231, %vm1232
    %v1234 = vsel %vm1233, %v1226, %v1230
    %v1235 = vand.u32 2147483647, %v1225
    %vm1236 = vcmp.eq.f32.partialorder %v1235, 8.507059e+37
    %v1237 = vand.u32 %v1225, 2147483648
    %v1238 = vor.u32 1.1754944e-38, %v1237
    %v1239 = vsel %vm1236, %v1238, %v1234
    %v1240 = vmul.f32 1.0, %v1239
    %v1241 = vmul.f32 %v1221, %v1240
    %v1242 = vperm.slane %v1174, 0
    %1243 = vmatpush.msra.mxu0 %v1170
    %1244 = vmatpush.msra.mxu0 %v1169
    %1245 = vmatpush.msra.mxu0 %v1168
    %1246 = vmatpush.msra.mxu0 %v1167
    %1247 = vmatpush.msra.mxu0 %v1166
    %1248 = vmatpush.msra.mxu0 %v1165
    %1249 = vmatpush.msra.mxu0 %v1164
    %1250 = vmatpush.msra.mxu0 %v1163
    %1251 = vmatpush.msra.mxu0 %v1162
    %1252 = vmatpush.msra.mxu0 %v1161
    %1253 = vmatpush.msra.mxu0 %v1160
    %1254 = vmatpush.msra.mxu0 %v1159
    %1255 = vmatpush.msra.mxu0 %v1158
    %1256 = vmatpush.msra.mxu0 %v1157
    %1257 = vmatpush.msra.mxu0 %v1156
    %1258 = vmatpush.msra.mxu0 %v1155
    %1259 = vmatmul.f32.gmra.mxu0 %v1241
    %v1260 = vpop.f32.mrf.mxu0
    %v1261 = vadd.f32 %v1242, %v1260
    %1262 = vdwg.mxu0
    %s1263 = scalar_lea.vmem [#allocation3], 1024
    %v1264 = vld [vmem:[%s1263] sm:$0xff]
    %v1265 = vld [vmem:[%s1263 + $0x8] sm:$0xff]
    %v1266 = vld [vmem:[%s1263 + $0x10] sm:$0xff]
    %v1267 = vld [vmem:[%s1263 + $0x18] sm:$0xff]
    %v1268 = vld [vmem:[%s1263 + $0x20] sm:$0xff]
    %v1269 = vld [vmem:[%s1263 + $0x28] sm:$0xff]
    %v1270 = vld [vmem:[%s1263 + $0x30] sm:$0xff]
    %v1271 = vld [vmem:[%s1263 + $0x38] sm:$0xff]
    %v1272 = vld [vmem:[%s1263 + $0x40] sm:$0xff]
    %v1273 = vld [vmem:[%s1263 + $0x48] sm:$0xff]
    %v1274 = vld [vmem:[%s1263 + $0x50] sm:$0xff]
    %v1275 = vld [vmem:[%s1263 + $0x58] sm:$0xff]
    %v1276 = vld [vmem:[%s1263 + $0x60] sm:$0xff]
    %v1277 = vld [vmem:[%s1263 + $0x68] sm:$0xff]
    %v1278 = vld [vmem:[%s1263 + $0x70] sm:$0xff]
    %v1279 = vld [vmem:[%s1263 + $0x78] sm:$0xff]
    %s1280 = scalar_lea.vmem [#allocation3], 1152
    %v1281 = vld [vmem:[%s1280] sm:$0xff]
    %v1282 = vld [vmem:[%s1280 + $0x8] sm:$0xff]
    %v1283 = vld [vmem:[%s1280 + $0x10] sm:$0xff]
    %v1284 = vld [vmem:[%s1280 + $0x18] sm:$0xff]
    %v1285 = vld [vmem:[%s1280 + $0x20] sm:$0xff]
    %v1286 = vld [vmem:[%s1280 + $0x28] sm:$0xff]
    %v1287 = vld [vmem:[%s1280 + $0x30] sm:$0xff]
    %v1288 = vld [vmem:[%s1280 + $0x38] sm:$0xff]
    %v1289 = vld [vmem:[%s1280 + $0x40] sm:$0xff]
    %v1290 = vld [vmem:[%s1280 + $0x48] sm:$0xff]
    %v1291 = vld [vmem:[%s1280 + $0x50] sm:$0xff]
    %v1292 = vld [vmem:[%s1280 + $0x58] sm:$0xff]
    %v1293 = vld [vmem:[%s1280 + $0x60] sm:$0xff]
    %v1294 = vld [vmem:[%s1280 + $0x68] sm:$0xff]
    %v1295 = vld [vmem:[%s1280 + $0x70] sm:$0xff]
    %v1296 = vld [vmem:[%s1280 + $0x78] sm:$0xff]
    %v1297 = vld [vmem:[%s2 + $0x8] sm:$0x1]
    %v1298 = vld [vmem:[%s2 + $0x9] sm:$0x1]
    %v1299 = vld [vmem:[%s2 + $0xa] sm:$0x1]
    %v1300 = vld [vmem:[%s2 + $0xb] sm:$0x1]
    %v1301 = vperm.slane %v1297, 0
    %1302 = vmatpush.msra.mxu0 %v1279
    %1303 = vmatpush.msra.mxu0 %v1278
    %1304 = vmatpush.msra.mxu0 %v1277
    %1305 = vmatpush.msra.mxu0 %v1276
    %1306 = vmatpush.msra.mxu0 %v1275
    %1307 = vmatpush.msra.mxu0 %v1274
    %1308 = vmatpush.msra.mxu0 %v1273
    %1309 = vmatpush.msra.mxu0 %v1272
    %1310 = vmatpush.msra.mxu0 %v1271
    %1311 = vmatpush.msra.mxu0 %v1270
    %1312 = vmatpush.msra.mxu0 %v1269
    %1313 = vmatpush.msra.mxu0 %v1268
    %1314 = vmatpush.msra.mxu0 %v1267
    %1315 = vmatpush.msra.mxu0 %v1266
    %1316 = vmatpush.msra.mxu0 %v1265
    %1317 = vmatpush.msra.mxu0 %v1264
    %1318 = vmatmul.f32.gmra.mxu0 %v1136
    %v1319 = vpop.f32.mrf.mxu0
    %v1320 = vadd.f32 %v1301, %v1319
    %1321 = vdwg.mxu0
    %v1322 = vmul.f32 %v1320, %v34
    %1323 = vadd.xlane.f32.xlu0 %v1322
    %v1324 = vpop.xlane.xlu0 %1323
    %v1325 = vmul.f32 %v1324, 0.03125
    %v1326 = vsub.f32 %v1320, %v1325
    %v1327 = vmul.f32 %v1326, %v34
    %v1328 = vmul.f32 %v1327, %v1327
    %1329 = vadd.xlane.f32.xlu0 %v1328
    %v1330 = vpop.xlane.xlu0 %1329
    %v1331 = vmul.f32 %v1330, 0.03125
    %v1332 = vadd.f32 %v1331, 1e-05
    %v1333 = vrsqrt.pop %v1332
    %v1334 = vmul.f32 %v1333, %v1332
    %v1335 = vmul.f32 %v1334, %v1333
    %v1336 = vmul.f32 0.5, %v1335
    %v1337 = vsub.f32 1.5, %v1336
    %v1338 = vmul.f32 %v1333, %v1337
    %vm1339 = vweird.f32 %v1332
    %vm1340 = vweird.f32 %v1333
    %vm1341 = vmor %vm1339, %vm1340
    %v1342 = vsel %vm1341, %v1333, %v1338
    %v1343 = vmul.f32 %v1327, %v1342
    %v1344 = vperm.slane %v1298, 0
    %v1345 = vmul.f32 %v1343, %v1344
    %v1346 = vperm.slane %v1299, 0
    %v1347 = vadd.f32 %v1345, %v1346
    %v1348 = vxor.u32 %v1347, 2147483648
    %v1349 = vmul.f32 %v1348, 1.442695
    %v1350 = vpow.pop %v1349
    %v1351 = vadd.f32 %v1350, 1.0
    %v1352 = vrcp.pop %v1351
    %v1353 = vmul.f32 %v1351, %v1352
    %v1354 = vsub.f32 1.0, %v1353
    %v1355 = vmul.f32 %v1352, %v1354
    %v1356 = vadd.f32 %v1352, %v1355
    %vm1357 = vweird.f32 %v1351
    %vm1358 = vweird.f32 %v1352
    %vm1359 = vmor %vm1357, %vm1358
    %v1360 = vsel %vm1359, %v1352, %v1356
    %v1361 = vand.u32 2147483647, %v1351
    %vm1362 = vcmp.eq.f32.partialorder %v1361, 8.507059e+37
    %v1363 = vand.u32 %v1351, 2147483648
    %v1364 = vor.u32 1.1754944e-38, %v1363
    %v1365 = vsel %vm1362, %v1364, %v1360
    %v1366 = vmul.f32 1.0, %v1365
    %v1367 = vmul.f32 %v1347, %v1366
    %v1368 = vperm.slane %v1300, 0
    %1369 = vmatpush.msra.mxu0 %v1296
    %1370 = vmatpush.msra.mxu0 %v1295
    %1371 = vmatpush.msra.mxu0 %v1294
    %1372 = vmatpush.msra.mxu0 %v1293
    %1373 = vmatpush.msra.mxu0 %v1292
    %1374 = vmatpush.msra.mxu0 %v1291
    %1375 = vmatpush.msra.mxu0 %v1290
    %1376 = vmatpush.msra.mxu0 %v1289
    %1377 = vmatpush.msra.mxu0 %v1288
    %1378 = vmatpush.msra.mxu0 %v1287
    %1379 = vmatpush.msra.mxu0 %v1286
    %1380 = vmatpush.msra.mxu0 %v1285
    %1381 = vmatpush.msra.mxu0 %v1284
    %1382 = vmatpush.msra.mxu0 %v1283
    %1383 = vmatpush.msra.mxu0 %v1282
    %1384 = vmatpush.msra.mxu0 %v1281
    %1385 = vmatmul.f32.gmra.mxu0 %v1367
    %v1386 = vpop.f32.mrf.mxu0
    %v1387 = vadd.f32 %v1368, %v1386
    %1388 = vdwg.mxu0
    %v1389 = vxor.u32 %v1261, 2147483648
    %v1390 = vmul.f32 %v1389, 1.442695
    %v1391 = vpow.pop %v1390
    %v1392 = vadd.f32 %v1391, 1.0
    %v1393 = vrcp.pop %v1392
    %v1394 = vmul.f32 %v1392, %v1393
    %v1395 = vsub.f32 1.0, %v1394
    %v1396 = vmul.f32 %v1393, %v1395
    %v1397 = vadd.f32 %v1393, %v1396
    %vm1398 = vweird.f32 %v1392
    %vm1399 = vweird.f32 %v1393
    %vm1400 = vmor %vm1398, %vm1399
    %v1401 = vsel %vm1400, %v1393, %v1397
    %v1402 = vand.u32 2147483647, %v1392
    %vm1403 = vcmp.eq.f32.partialorder %v1402, 8.507059e+37
    %v1404 = vand.u32 %v1392, 2147483648
    %v1405 = vor.u32 1.1754944e-38, %v1404
    %v1406 = vsel %vm1403, %v1405, %v1401
    %v1407 = vmul.f32 1.0, %v1406
    %v1408 = vsel %vm35, 1, 0
    %vm1409 = vcmp.eq.s32.totalorder %v1408, 1
    %v1410 = vsel %vm1409, %v1387, -inf
    %1411 = vmax.xlane.f32.xlu0 %v1410
    %v1412 = vpop.xlane.xlu0 %1411
    %v1413 = vsub.f32 %v1387, %v1412
    %v1414 = vsel %vm1409, %v1413, -inf
    %v1415 = vmul.f32 %v1414, 1.442695
    %v1416 = vpow.pop %v1415
    %1417 = vadd.xlane.f32.xlu0 %v1416
    %v1418 = vpop.xlane.xlu0 %1417
    %v1419 = vrcp.pop %v1418
    %v1420 = vmul.f32 %v1418, %v1419
    %v1421 = vsub.f32 1.0, %v1420
    %v1422 = vmul.f32 %v1419, %v1421
    %v1423 = vadd.f32 %v1419, %v1422
    %vm1424 = vweird.f32 %v1418
    %vm1425 = vweird.f32 %v1419
    %vm1426 = vmor %vm1424, %vm1425
    %v1427 = vsel %vm1426, %v1419, %v1423
    %v1428 = vand.u32 2147483647, %v1418
    %vm1429 = vcmp.eq.f32.partialorder %v1428, 8.507059e+37
    %v1430 = vand.u32 %v1418, 2147483648
    %v1431 = vor.u32 1.1754944e-38, %v1430
    %v1432 = vsel %vm1429, %v1431, %v1427
    %v1433 = vmul.f32 %v1416, %v1432
    %1434 = vst [vmem:[%s3] sm:$0xff] %v1407
    %1435 = vst [vmem:[%s3 + $0x8] sm:$0xff] %v1433
    // Predicated region
    $region18: #{portfolio_gru_with_prob_forward.1} parent=1 // pred_check
      _
    $region19: #{portfolio_gru_with_prob_forward.1} parent=1 // pred_check_branch
      %1437 = sbr.rel (0) target = $region21
    $region20: #{portfolio_gru_with_prob_forward.1} parent=1 // pred_region
      _
    $region21: #{portfolio_gru_with_prob_forward.1} parent=1 // pred_fallthru
      _
    // Predicated region
    $region22: #{portfolio_gru_with_prob_forward.1} parent=1 // pred_check
      _
    $region23: #{portfolio_gru_with_prob_forward.1} parent=1 // pred_check_branch
      %1439 = sbr.rel (0) target = $region25
    $region24: #{portfolio_gru_with_prob_forward.1} parent=1 // pred_region
      _
    $region25: #{portfolio_gru_with_prob_forward.1} parent=1 // pred_fallthru
      _
    %1440 = vsyncpa [#allocation4], 1

</llo_original>
